<compile_context>
chip_gen: v7x
topology: tpu7x:2x2x1
jax: 0.10.0
libtpu: 0.0.40
codegen_flags: <defaults>
</compile_context>

<pallas_src>
import jax
import jax.numpy as jnp
from jax.experimental import pallas as pl
from jax.experimental.pallas import tpu as pltpu


def _leaky_relu(x, slope=0.2):
    return jnp.where(x >= 0, x, slope * x)


def _item_model_kernel(
    pt_ref,     # (TB, U, D)   user embeddings of the item's interacting users
    er_ref,     # (TB, U, D)   rating embeddings
    mask_ref,   # (TB, U)      1.0 where user id > 0
    vitem_ref,  # (TB, D)      item_emb[iid] @ W1 @ W_att_a[D:]
    wga_ref,    # (2D, D)      g_u layer-1 weight ([:D] p_t path, [D:] rating path)
    wwide_ref,  # (D, 2D)      [W_gu_b@W1 | W_gu_b@W1@W_att_a[:D]]  (fused)
    wagg_ref,   # (D, D)       aggre_users_i weight
    misc_ref,   # (8, D)       stacked biases / attention output vector
    out_ref,    # (TB, D)
):
    TB, U, D = pt_ref.shape

    misc = misc_ref[...]
    b_gu_a = misc[0:1, :]      # (1, D)
    b_fused = misc[1:2, :]     # (1, D)  b_gu_b @ W1 + b1
    c_att = misc[2:3, :]       # (1, D)  all additive constants of attention layer 1
    b_agg = misc[3:4, :]       # (1, D)
    wab = misc[4:5, :]         # (1, D)  W_att_b^T
    b_ab = misc[5:6, 0:1]      # (1, 1)  b_att_b

    wga = wga_ref[...]
    wp = wga[:D, :]            # p_t branch of g_u layer 1
    we = wga[D:, :]            # rating-embedding branch

    # g_u layer 1 over [p_t, er] without ever materializing the concat
    pt = pt_ref[...].reshape(TB * U, D)
    er = er_ref[...].reshape(TB * U, D)
    h = _leaky_relu(
        jnp.dot(pt, wp, preferred_element_type=jnp.float32)
        + jnp.dot(er, we, preferred_element_type=jnp.float32)
        + b_gu_a)

    # one wide matmul producing [wf | a]: g_u layer 2, w1 and the wf-branch of
    # the attention layer share the same LHS h (no nonlinearity in between)
    wide = jnp.dot(h, wwide_ref[...], preferred_element_type=jnp.float32)  # (TB*U, 2D)
    wf = wide[:, :D] + b_fused                                             # w1(f_jt)
    a_nb = wide[:, D:]

    mask3 = mask_ref[...][:, :, None]        # (TB, U, 1)
    vitem3 = vitem_ref[...][:, None, :]      # (TB, 1, D)

    # attention MLP layer 1: add the (collapsed) q_j branch + all constants
    h2 = _leaky_relu(a_nb.reshape(TB, U, D) + mask3 * vitem3 + c_att)

    # attention MLP layer 2 (D -> 1) as a lane reduction
    logit = jnp.sum(h2 * wab, axis=2, keepdims=True) + b_ab        # (TB, U, 1)

    # masked exp-normalization over the U users (stabilized; eps as in reference)
    m = jnp.max(jnp.where(mask3 > 0, logit, jnp.float32(-1e30)),
                axis=1, keepdims=True)
    m = jnp.maximum(m, 0.0)                  # never scale e up; exact ref when m<=0
    e = jnp.exp(logit - m) * mask3
    denom = jnp.sum(e, axis=1, keepdims=True) + 1e-10              # (TB, 1, 1)
    miu = e * pl.reciprocal(denom, approx=True)

    # weighted aggregation + Linear(D -> D) + ReLU  (aggre_users_i)
    s = jnp.sum(miu * wf.reshape(TB, U, D), axis=1)                # (TB, D)
    z = jnp.dot(s, wagg_ref[...], preferred_element_type=jnp.float32) + b_agg
    out_ref[...] = jnp.maximum(z, 0.0)


def _round8(x):
    return max(8, (x + 7) // 8 * 8)


def _pick_tb(B, U, D, *, target_block_bytes=2 << 20, min_steps=8):
    """Items per grid step.

    Size the dominant (p_t + er) streams to ~2 MiB per step (HBM-roofline
    regime, well under the per-generation VMEM budget with double buffering),
    while keeping >= min_steps grid steps when the batch allows so the DMA
    pipeline -- and both v7x TensorCores -- have iterations to overlap.
    """
    row_bytes = 4 * (2 * U * D + U + 2 * D)        # p_t + er + mask + v_item + out
    tb = _round8(target_block_bytes // row_bytes)
    tb = min(tb, _round8(B))                       # don't exceed the (8-padded) batch
    tb = min(tb, _round8(-(-B // min_steps)))      # keep ~min_steps grid steps
    # nudge toward an even step count so both v7x TensorCores pipeline equally
    steps = -(-B // tb)
    if steps >= 3 and steps % 2 == 1:
        tb2 = _round8(-(-B // (steps + 1)))
        if (-(-B // tb2)) % 2 == 0:
            tb = tb2
    return tb


def item_model_forward(iids, i_user_pad, params, *, tb=None):
    D = params["W1"].shape[0]
    B, U, _ = i_user_pad.shape

    # pad U to a multiple of 8 with padding users (id 0 -> mask 0, no effect)
    U_pad = _round8(U)
    if U_pad != U:
        i_user_pad = jnp.pad(i_user_pad, ((0, 0), (0, U_pad - U), (0, 0)))

    if tb is None:
        tb = _pick_tb(B, U_pad, D)
    B_pad = -(-B // tb) * tb
    if B_pad != B:
        i_user_pad = jnp.pad(i_user_pad, ((0, B_pad - B), (0, 0), (0, 0)))
        iids = jnp.pad(iids, (0, B_pad - B))

    # ---- glue: embedding gathers + mask (plain JAX; no concat materialized) ----
    p_t = params["user_emb"][i_user_pad[:, :, 0]]                  # (B', U', D)
    er = params["rate_emb"][i_user_pad[:, :, 1]]                   # (B', U', D)
    mask = (i_user_pad[:, :, 0] > 0).astype(jnp.float32)           # (B', U')

    # ---- algebraic weight fusion (f32 "highest" so fused == reference) ----
    with jax.default_matmul_precision("highest"):
        W1, b1 = params["W1"], params["b1"]
        waa_f = params["W_att_a"][:D]          # wf branch of attention layer 1
        waa_q = params["W_att_a"][D:]          # q_j branch
        W_fused = params["W_gu_b"] @ W1                                 # (D, D)
        b_fused = params["b_gu_b"] @ W1 + b1                            # (D,)
        W_wide = jnp.concatenate([W_fused, W_fused @ waa_f], axis=1)    # (D, 2D)
        c_att = b_fused @ waa_f + b1 @ waa_q + params["b_att_a"]        # (D,)
        v_item = (params["item_emb"][iids] @ W1) @ waa_q                # (B', D)

    misc = jnp.zeros((8, D), jnp.float32)
    misc = misc.at[0].set(params["b_gu_a"])
    misc = misc.at[1].set(b_fused)
    misc = misc.at[2].set(c_att)
    misc = misc.at[3].set(params["b_agg"])
    misc = misc.at[4].set(params["W_att_b"][:, 0])
    misc = misc.at[5, :].set(params["b_att_b"][0])

    weight_arrays = [params["W_gu_a"], W_wide, params["W_agg"], misc]

    data_specs = [
        pl.BlockSpec((tb, U_pad, D), lambda b: (b, 0, 0)),   # p_t
        pl.BlockSpec((tb, U_pad, D), lambda b: (b, 0, 0)),   # rating emb
        pl.BlockSpec((tb, U_pad), lambda b: (b, 0)),         # mask (dense 2D)
        pl.BlockSpec((tb, D), lambda b: (b, 0)),             # v_item (dense 2D)
    ]
    weight_specs = [
        pl.BlockSpec(w.shape, lambda b, n=w.ndim: (0,) * n) for w in weight_arrays
    ]

    out = pl.pallas_call(
        _item_model_kernel,
        out_shape=jax.ShapeDtypeStruct((B_pad, D), jnp.float32),
        grid=(B_pad // tb,),
        in_specs=data_specs + weight_specs,
        out_specs=pl.BlockSpec((tb, D), lambda b: (b, 0)),
        compiler_params=pltpu.CompilerParams(
            dimension_semantics=("parallel",),
            vmem_limit_bytes=32 * 1024 * 1024,
        ),
    )(p_t, er, mask, v_item, *weight_arrays)
    return out[:B]


def reference_forward(iids, i_user_pad, params):
    """Pure-JAX mirror of the PyTorch forward (eval mode), unfused weights."""
    with jax.default_matmul_precision("highest"):
        p_t = params["user_emb"][i_user_pad[:, :, 0]]
        mask = (i_user_pad[:, :, 0] > 0).astype(jnp.float32)
        er = params["rate_emb"][i_user_pad[:, :, 1]]
        x = jnp.concatenate([p_t, er], axis=2)
        h = _leaky_relu(x @ params["W_gu_a"] + params["b_gu_a"])
        f_jt = h @ params["W_gu_b"] + params["b_gu_b"]
        q_j = mask[..., None] * params["item_emb"][iids][:, None, :]
        wf = f_jt @ params["W1"] + params["b1"]
        wq = q_j @ params["W1"] + params["b1"]
        a = jnp.concatenate([wf, wq], axis=2)
        h2 = _leaky_relu(a @ params["W_att_a"] + params["b_att_a"])
        miu = (h2 @ params["W_att_b"] + params["b_att_b"])[..., 0]
        miu = jnp.exp(miu) * mask
        miu = miu / (jnp.sum(miu, axis=1, keepdims=True) + 1e-10)
        s = jnp.sum(miu[..., None] * wf, axis=1)
        return jnp.maximum(s @ params["W_agg"] + params["b_agg"], 0.0)


def init_params(key, emb_dim, num_users, num_items, num_rates):
    D = emb_dim
    keys = jax.random.split(key, 9)

    def lin(k, fan_in, fan_out, scale=0.1):
        kw, kb = jax.random.split(k)
        return (jax.random.normal(kw, (fan_in, fan_out), jnp.float32) * scale,
                jax.random.normal(kb, (fan_out,), jnp.float32) * scale)

    params = {
        "user_emb": jax.random.normal(keys[0], (num_users, D), jnp.float32) * 0.1,
        "item_emb": jax.random.normal(keys[1], (num_items, D), jnp.float32) * 0.1,
        "rate_emb": jax.random.normal(keys[2], (num_rates, D), jnp.float32) * 0.1,
    }
    params["W_gu_a"], params["b_gu_a"] = lin(keys[3], 2 * D, D)   # g_u layer 1
    params["W_gu_b"], params["b_gu_b"] = lin(keys[4], D, D)       # g_u layer 2
    params["W1"], params["b1"] = lin(keys[5], D, D)               # w1
    params["W_att_a"], params["b_att_a"] = lin(keys[6], 2 * D, D) # att layer 1
    params["W_att_b"], params["b_att_b"] = lin(keys[7], D, 1)     # att layer 2
    params["W_agg"], params["b_agg"] = lin(keys[8], D, D)         # aggre_users_i
    return params


if __name__ == "__main__":
    B, U, D = 32, 16, 32
    num_users, num_items, num_rates = 64, 32, 6

    key = jax.random.PRNGKey(0)
    kp, ki, ku, kr = jax.random.split(key, 4)
    params = init_params(kp, D, num_users, num_items, num_rates)

    iids = jax.random.randint(ki, (B,), 0, num_items)
    user_ids = jax.random.randint(ku, (B, U), 0, num_users)   # id 0 == padding
    rate_ids = jax.random.randint(kr, (B, U), 0, num_rates)
    i_user_pad = jnp.stack([user_ids, rate_ids], axis=-1)     # (B, U, 2)

    z = item_model_forward(iids, i_user_pad, params)
    jax.block_until_ready(z)

    z_ref = reference_forward(iids, i_user_pad, params)
    assert z.shape == (B, D)
    err = float(jnp.max(jnp.abs(z - z_ref)))
    assert jnp.allclose(z, z_ref, rtol=2e-3, atol=2e-3), f"max abs err {err}"
    print("KERNEL_OK")
</pallas_src>

<mosaic_0001>
module attributes {stable_mosaic.version = 11 : i64} {
  func.func @_item_model_kernel(%arg0: i32, %arg1: memref<8x16x32xf32, #tpu.memory_space<vmem>>, %arg2: memref<8x16x32xf32, #tpu.memory_space<vmem>>, %arg3: memref<8x16xf32, #tpu.memory_space<vmem>>, %arg4: memref<8x32xf32, #tpu.memory_space<vmem>>, %arg5: memref<64x32xf32, #tpu.memory_space<vmem>>, %arg6: memref<32x64xf32, #tpu.memory_space<vmem>>, %arg7: memref<32x32xf32, #tpu.memory_space<vmem>>, %arg8: memref<8x32xf32, #tpu.memory_space<vmem>>, %arg9: memref<8x32xf32, #tpu.memory_space<vmem>>) attributes {dimension_semantics = [#tpu.dimension_semantics<parallel>], iteration_bounds = array<i64: 4>, scalar_prefetch = 0 : i64, scratch_operands = 0 : i64, tpu.core_type = #tpu.core_type<tc>, window_params = [{transform_indices = @transform_0, window_bounds = array<i64: 8, 16, 32>}, {transform_indices = @transform_1, window_bounds = array<i64: 8, 16, 32>}, {transform_indices = @transform_2, window_bounds = array<i64: 8, 16>}, {transform_indices = @transform_3, window_bounds = array<i64: 8, 32>}, {pipeline_mode = #tpu.pipeline_mode<synchronous>, transform_indices = @transform_4, window_bounds = array<i64: 64, 32>}, {pipeline_mode = #tpu.pipeline_mode<synchronous>, transform_indices = @transform_5, window_bounds = array<i64: 32, 64>}, {pipeline_mode = #tpu.pipeline_mode<synchronous>, transform_indices = @transform_6, window_bounds = array<i64: 32, 32>}, {pipeline_mode = #tpu.pipeline_mode<synchronous>, transform_indices = @transform_7, window_bounds = array<i64: 8, 32>}, {transform_indices = @transform_8, window_bounds = array<i64: 8, 32>}]} {
    %c0 = arith.constant 0 : index
    %c0_0 = arith.constant 0 : index
    %0 = vector.load %arg8[%c0, %c0_0] : memref<8x32xf32, #tpu.memory_space<vmem>>, vector<8x32xf32>
    %1 = vector.extract_strided_slice %0 {offsets = [0, 0], sizes = [1, 32], strides = [1, 1]} : vector<8x32xf32> to vector<1x32xf32>
    %2 = vector.extract_strided_slice %0 {offsets = [1, 0], sizes = [1, 32], strides = [1, 1]} : vector<8x32xf32> to vector<1x32xf32>
    %3 = vector.extract_strided_slice %0 {offsets = [2, 0], sizes = [1, 32], strides = [1, 1]} : vector<8x32xf32> to vector<1x32xf32>
    %4 = vector.extract_strided_slice %0 {offsets = [3, 0], sizes = [1, 32], strides = [1, 1]} : vector<8x32xf32> to vector<1x32xf32>
    %5 = vector.extract_strided_slice %0 {offsets = [4, 0], sizes = [1, 32], strides = [1, 1]} : vector<8x32xf32> to vector<1x32xf32>
    %6 = vector.extract_strided_slice %0 {offsets = [5, 0], sizes = [1, 1], strides = [1, 1]} : vector<8x32xf32> to vector<1x1xf32>
    %c0_1 = arith.constant 0 : index
    %c0_2 = arith.constant 0 : index
    %7 = vector.load %arg5[%c0_1, %c0_2] : memref<64x32xf32, #tpu.memory_space<vmem>>, vector<64x32xf32>
    %8 = vector.extract_strided_slice %7 {offsets = [0, 0], sizes = [32, 32], strides = [1, 1]} : vector<64x32xf32> to vector<32x32xf32>
    %9 = vector.extract_strided_slice %7 {offsets = [32, 0], sizes = [32, 32], strides = [1, 1]} : vector<64x32xf32> to vector<32x32xf32>
    %c0_3 = arith.constant 0 : index
    %c0_4 = arith.constant 0 : index
    %c0_5 = arith.constant 0 : index
    %10 = vector.load %arg1[%c0_3, %c0_4, %c0_5] : memref<8x16x32xf32, #tpu.memory_space<vmem>>, vector<8x16x32xf32>
    %11 = vector.shape_cast %10 : vector<8x16x32xf32> to vector<128x32xf32>
    %c0_6 = arith.constant 0 : index
    %c0_7 = arith.constant 0 : index
    %c0_8 = arith.constant 0 : index
    %12 = vector.load %arg2[%c0_6, %c0_7, %c0_8] : memref<8x16x32xf32, #tpu.memory_space<vmem>>, vector<8x16x32xf32>
    %13 = vector.shape_cast %12 : vector<8x16x32xf32> to vector<128x32xf32>
    %cst = arith.constant dense<0.000000e+00> : vector<128x32xf32>
    %14 = tpu.matmul %11, %8, %cst {dimension_numbers = #tpu.dot_dimension_numbers<[1], [0], [0], [1], [0, 0, 1, 1], [], []>} : vector<128x32xf32>, vector<32x32xf32>, vector<128x32xf32> -> vector<128x32xf32>
    %cst_9 = arith.constant dense<0.000000e+00> : vector<128x32xf32>
    %15 = tpu.matmul %13, %9, %cst_9 {dimension_numbers = #tpu.dot_dimension_numbers<[1], [0], [0], [1], [0, 0, 1, 1], [], []>} : vector<128x32xf32>, vector<32x32xf32>, vector<128x32xf32> -> vector<128x32xf32>
    %16 = arith.addf %14, %15 : vector<128x32xf32>
    %17 = vector.broadcast %1 : vector<1x32xf32> to vector<128x32xf32>
    %18 = arith.addf %16, %17 : vector<128x32xf32>
    %cst_10 = arith.constant 0.000000e+00 : f32
    %19 = vector.broadcast %cst_10 : f32 to vector<128x32xf32>
    %20 = arith.cmpf oge, %18, %19 : vector<128x32xf32>
    %cst_11 = arith.constant 2.000000e-01 : f32
    %21 = vector.broadcast %cst_11 : f32 to vector<128x32xf32>
    %22 = arith.mulf %21, %18 : vector<128x32xf32>
    %23 = arith.select %20, %18, %22 : vector<128x32xi1>, vector<128x32xf32>
    %c0_12 = arith.constant 0 : index
    %c0_13 = arith.constant 0 : index
    %24 = vector.load %arg6[%c0_12, %c0_13] : memref<32x64xf32, #tpu.memory_space<vmem>>, vector<32x64xf32>
    %cst_14 = arith.constant dense<0.000000e+00> : vector<128x64xf32>
    %25 = tpu.matmul %23, %24, %cst_14 {dimension_numbers = #tpu.dot_dimension_numbers<[1], [0], [0], [1], [0, 0, 1, 1], [], []>} : vector<128x32xf32>, vector<32x64xf32>, vector<128x64xf32> -> vector<128x64xf32>
    %26 = vector.extract_strided_slice %25 {offsets = [0, 0], sizes = [128, 32], strides = [1, 1]} : vector<128x64xf32> to vector<128x32xf32>
    %27 = vector.broadcast %2 : vector<1x32xf32> to vector<128x32xf32>
    %28 = arith.addf %26, %27 : vector<128x32xf32>
    %29 = vector.extract_strided_slice %25 {offsets = [0, 32], sizes = [128, 32], strides = [1, 1]} : vector<128x64xf32> to vector<128x32xf32>
    %c0_15 = arith.constant 0 : index
    %c0_16 = arith.constant 0 : index
    %30 = vector.load %arg3[%c0_15, %c0_16] : memref<8x16xf32, #tpu.memory_space<vmem>>, vector<8x16xf32>
    %31 = vector.shape_cast %30 : vector<8x16xf32> to vector<8x16x1xf32>
    %c0_17 = arith.constant 0 : index
    %c0_18 = arith.constant 0 : index
    %32 = vector.load %arg4[%c0_17, %c0_18] : memref<8x32xf32, #tpu.memory_space<vmem>>, vector<8x32xf32>
    %33 = vector.shape_cast %32 : vector<8x32xf32> to vector<8x1x32xf32>
    %34 = vector.shape_cast %29 : vector<128x32xf32> to vector<8x16x32xf32>
    %35 = vector.broadcast %31 : vector<8x16x1xf32> to vector<8x16x32xf32>
    %36 = vector.broadcast %33 : vector<8x1x32xf32> to vector<8x16x32xf32>
    %37 = arith.mulf %35, %36 : vector<8x16x32xf32>
    %38 = arith.addf %34, %37 : vector<8x16x32xf32>
    %39 = vector.shape_cast %3 : vector<1x32xf32> to vector<1x1x32xf32>
    %40 = vector.broadcast %39 : vector<1x1x32xf32> to vector<8x16x32xf32>
    %41 = arith.addf %38, %40 : vector<8x16x32xf32>
    %cst_19 = arith.constant 0.000000e+00 : f32
    %42 = vector.broadcast %cst_19 : f32 to vector<8x16x32xf32>
    %43 = arith.cmpf oge, %41, %42 : vector<8x16x32xf32>
    %cst_20 = arith.constant 2.000000e-01 : f32
    %44 = vector.broadcast %cst_20 : f32 to vector<8x16x32xf32>
    %45 = arith.mulf %44, %41 : vector<8x16x32xf32>
    %46 = arith.select %43, %41, %45 : vector<8x16x32xi1>, vector<8x16x32xf32>
    %47 = vector.shape_cast %5 : vector<1x32xf32> to vector<1x1x32xf32>
    %48 = vector.broadcast %47 : vector<1x1x32xf32> to vector<8x16x32xf32>
    %49 = arith.mulf %46, %48 : vector<8x16x32xf32>
    %cst_21 = arith.constant dense<0.000000e+00> : vector<8x16xf32>
    %50 = vector.multi_reduction <add>, %49, %cst_21 [2] : vector<8x16x32xf32> to vector<8x16xf32>
    %51 = vector.shape_cast %50 : vector<8x16xf32> to vector<8x16x1xf32>
    %52 = vector.shape_cast %6 : vector<1x1xf32> to vector<1x1x1xf32>
    %53 = vector.broadcast %52 : vector<1x1x1xf32> to vector<8x16x1xf32>
    %54 = arith.addf %51, %53 : vector<8x16x1xf32>
    %cst_22 = arith.constant 0.000000e+00 : f32
    %55 = vector.broadcast %cst_22 : f32 to vector<8x16x1xf32>
    %56 = arith.cmpf ogt, %31, %55 : vector<8x16x1xf32>
    %cst_23 = arith.constant -1.000000e+30 : f32
    %57 = vector.broadcast %cst_23 : f32 to vector<8x16x1xf32>
    %58 = arith.select %56, %54, %57 : vector<8x16x1xi1>, vector<8x16x1xf32>
    %cst_24 = arith.constant dense<0xFF800000> : vector<8x1xf32>
    %59 = vector.multi_reduction <maximumf>, %58, %cst_24 [1] : vector<8x16x1xf32> to vector<8x1xf32>
    %60 = vector.shape_cast %59 : vector<8x1xf32> to vector<8x1x1xf32>
    %cst_25 = arith.constant 0.000000e+00 : f32
    %61 = vector.broadcast %cst_25 : f32 to vector<8x1x1xf32>
    %62 = arith.maximumf %60, %61 : vector<8x1x1xf32>
    %63 = vector.broadcast %62 : vector<8x1x1xf32> to vector<8x16x1xf32>
    %64 = arith.subf %54, %63 : vector<8x16x1xf32>
    %65 = math.exp %64 : vector<8x16x1xf32>
    %66 = arith.mulf %65, %31 : vector<8x16x1xf32>
    %cst_26 = arith.constant dense<0.000000e+00> : vector<8x1xf32>
    %67 = vector.multi_reduction <add>, %66, %cst_26 [1] : vector<8x16x1xf32> to vector<8x1xf32>
    %68 = vector.shape_cast %67 : vector<8x1xf32> to vector<8x1x1xf32>
    %cst_27 = arith.constant 1.000000e-10 : f32
    %69 = vector.broadcast %cst_27 : f32 to vector<8x1x1xf32>
    %70 = arith.addf %68, %69 : vector<8x1x1xf32>
    %71 = tpu.reciprocal %70 {approx = true} : vector<8x1x1xf32> -> vector<8x1x1xf32>
    %72 = vector.broadcast %71 : vector<8x1x1xf32> to vector<8x16x1xf32>
    %73 = arith.mulf %66, %72 : vector<8x16x1xf32>
    %74 = vector.shape_cast %28 : vector<128x32xf32> to vector<8x16x32xf32>
    %75 = vector.broadcast %73 : vector<8x16x1xf32> to vector<8x16x32xf32>
    %76 = arith.mulf %75, %74 : vector<8x16x32xf32>
    %cst_28 = arith.constant dense<0.000000e+00> : vector<8x32xf32>
    %77 = vector.multi_reduction <add>, %76, %cst_28 [1] : vector<8x16x32xf32> to vector<8x32xf32>
    %c0_29 = arith.constant 0 : index
    %c0_30 = arith.constant 0 : index
    %78 = vector.load %arg7[%c0_29, %c0_30] : memref<32x32xf32, #tpu.memory_space<vmem>>, vector<32x32xf32>
    %cst_31 = arith.constant dense<0.000000e+00> : vector<8x32xf32>
    %79 = tpu.matmul %77, %78, %cst_31 {dimension_numbers = #tpu.dot_dimension_numbers<[1], [0], [0], [1], [0, 0, 1, 1], [], []>} : vector<8x32xf32>, vector<32x32xf32>, vector<8x32xf32> -> vector<8x32xf32>
    %80 = vector.broadcast %4 : vector<1x32xf32> to vector<8x32xf32>
    %81 = arith.addf %79, %80 : vector<8x32xf32>
    %cst_32 = arith.constant 0.000000e+00 : f32
    %82 = vector.broadcast %cst_32 : f32 to vector<8x32xf32>
    %83 = arith.maximumf %81, %82 : vector<8x32xf32>
    %c0_33 = arith.constant 0 : index
    %c0_34 = arith.constant 0 : index
    %84 = vector.load %arg9[%c0_33, %c0_34] : memref<8x32xf32, #tpu.memory_space<vmem>>, vector<8x32xf32>
    tpu.vector_store %arg9[%c0_33, %c0_34], %83 {strides = array<i32>} : memref<8x32xf32, #tpu.memory_space<vmem>>, vector<8x32xf32>,
    return
  }
  func.func @transform_0(%arg0: i32) -> (i32, i32, i32) {
    %c0_i32 = arith.constant 0 : i32
    %c0_i32_0 = arith.constant 0 : i32
    %c0_i32_1 = arith.constant 0 : i32
    return %arg0, %c0_i32, %c0_i32_0 : i32, i32, i32
  }
  func.func @transform_1(%arg0: i32) -> (i32, i32, i32) {
    %c0_i32 = arith.constant 0 : i32
    %c0_i32_0 = arith.constant 0 : i32
    %c0_i32_1 = arith.constant 0 : i32
    return %arg0, %c0_i32, %c0_i32_0 : i32, i32, i32
  }
  func.func @transform_2(%arg0: i32) -> (i32, i32) {
    %c0_i32 = arith.constant 0 : i32
    %c0_i32_0 = arith.constant 0 : i32
    return %arg0, %c0_i32 : i32, i32
  }
  func.func @transform_3(%arg0: i32) -> (i32, i32) {
    %c0_i32 = arith.constant 0 : i32
    %c0_i32_0 = arith.constant 0 : i32
    return %arg0, %c0_i32 : i32, i32
  }
  func.func @transform_4(%arg0: i32) -> (i32, i32) {
    %c0_i32 = arith.constant 0 : i32
    %c0_i32_0 = arith.constant 0 : i32
    %c0_i32_1 = arith.constant 0 : i32
    return %c0_i32, %c0_i32_0 : i32, i32
  }
  func.func @transform_5(%arg0: i32) -> (i32, i32) {
    %c0_i32 = arith.constant 0 : i32
    %c0_i32_0 = arith.constant 0 : i32
    %c0_i32_1 = arith.constant 0 : i32
    return %c0_i32, %c0_i32_0 : i32, i32
  }
  func.func @transform_6(%arg0: i32) -> (i32, i32) {
    %c0_i32 = arith.constant 0 : i32
    %c0_i32_0 = arith.constant 0 : i32
    %c0_i32_1 = arith.constant 0 : i32
    return %c0_i32, %c0_i32_0 : i32, i32
  }
  func.func @transform_7(%arg0: i32) -> (i32, i32) {
    %c0_i32 = arith.constant 0 : i32
    %c0_i32_0 = arith.constant 0 : i32
    %c0_i32_1 = arith.constant 0 : i32
    return %c0_i32, %c0_i32_0 : i32, i32
  }
  func.func @transform_8(%arg0: i32) -> (i32, i32) {
    %c0_i32 = arith.constant 0 : i32
    %c0_i32_0 = arith.constant 0 : i32
    return %arg0, %c0_i32 : i32, i32
  }
}

</mosaic_0001>

<llo_original>
// kernel: tpu_custom_call.1
$region0: #{tpu_custom_call.1}
  #allocation0 [shape = 'u32[]', space=smem, size = 0x4, offset = 0x4, fixed_abs, tag = 'smem constant byte address 0x4 - core index']
  #allocation1 [shape = 'u32[144,128]{1,0:T(1,128)}', space=vmem, size = 0x12000, scoped, tag = 'internal scratch']
  %s0 = inlined_call_operand.hbm [shape: f32[32,16,32], index: 0, kind: input, shape index: {}]
  %s1 = inlined_call_operand.hbm [shape: f32[32,16,32], index: 1, kind: input, shape index: {}]
  %s2 = inlined_call_operand.vmem [shape: f32[32,16], index: 2, kind: input, shape index: {}]
  %s3 = inlined_call_operand.vmem [shape: f32[32,32], index: 3, kind: input, shape index: {}]
  %s4 = inlined_call_operand.vmem [shape: f32[64,32], index: 4, kind: input, shape index: {}]
  %s5 = inlined_call_operand.vmem [shape: f32[32,64], index: 5, kind: input, shape index: {}]
  %s6 = inlined_call_operand.vmem [shape: f32[32,32], index: 6, kind: input, shape index: {}]
  %s7 = inlined_call_operand.vmem [shape: f32[8,32], index: 7, kind: input, shape index: {}]
  %s8 = inlined_call_operand.hbm [shape: f32[32,32], index: 8, kind: output, shape index: {}]
  %s9 = sld [smem:[#allocation0]]
  $region73: #{tpu_custom_call.1} parent=0
    _
  %s11 = ssub.s32 1, %s9
  %s12 = scalar_select 0, %s11, %s9
  $region1: #{tpu_custom_call.1} parent=0
    #allocation2 [shape = 'u8[131072]{0}', space=vmem, size = 0x20000, scoped, tag = 'input window, operand 0']
    #allocation3 [shape = 's32[2]{0}', space=sflag, size = 0x8, scoped, tag = 'scoped memory for tpu_custom_call.1']
    #allocation4 [shape = 's32[2]{0}', space=sflag, size = 0x8, scoped, tag = 'scoped memory for tpu_custom_call.1']
    #allocation5 [shape = 'u8[131072]{0}', space=vmem, size = 0x20000, scoped, tag = 'input window, operand 1']
    #allocation6 [shape = 's32[2]{0}', space=sflag, size = 0x8, scoped, tag = 'scoped memory for tpu_custom_call.1']
    #allocation7 [shape = 'u8[8192]{0}', space=vmem, size = 0x2000, scoped, tag = 'output window, operand 0']
    %13 = vsyncpa [#allocation3], 0
    %s14 = scalar_lea.sflag [#allocation3], 1
    %15 = vsyncpa %s14, 0
    %16 = vsyncpa [#allocation6], 0
    %s17 = scalar_lea.sflag [#allocation6], 1
    %18 = vsyncpa %s17, 0
    %19 = vsyncpa [#allocation4], 0
    %s20 = scalar_lea.sflag [#allocation4], 1
    %21 = vsyncpa %s20, 0
    loop: start=0, step=1, limit=6
    $region2: #{tpu_custom_call.1} parent=1 // loop_pre_header
      _
    $region3: #{tpu_custom_call.1} parent=1 // loop_header
      %s23 = sphi 0, %s27
      %p24 = scmp.ge.s32.totalorder %s23, 6
      %s33 = sphi 0, %s35
      %s36 = sphi 0, %s33
      %s37 = sphi 0, %s36
      %s53 = sphi 0, %s37
      %s59 = sphi 0, %s61
      %s62 = sphi 0, %s59
      %s63 = sphi 0, %s62
      %s79 = sphi 0, %s63
      %s85 = sphi 0, %s87
      %s88 = sphi 0, %s85
      %s89 = sphi 0, %s88
      %s105 = sphi 0, %s89
      %s111 = sphi 0, %s113
      %s114 = sphi 0, %s111
      %s115 = sphi 0, %s114
      %s131 = sphi 0, %s115
      %s135 = sphi 0, %s135
      %s137 = sphi 0, %s135
      %s138 = sphi 0, %s137
      %s152 = sphi 0, %s138
      %s156 = sphi 0, %s156
      %s158 = sphi 0, %s156
      %s159 = sphi 0, %s158
      %s173 = sphi 0, %s159
      %s177 = sphi 0, %s177
      %s179 = sphi 0, %s177
      %s180 = sphi 0, %s179
      %s194 = sphi 0, %s180
      %s198 = sphi 0, %s198
      %s200 = sphi 0, %s198
      %s201 = sphi 0, %s200
      %s215 = sphi 0, %s201
      %s221 = sphi 0, %s223
      %s224 = sphi 0, %s221
      %s225 = sphi 0, %s224
      %s241 = sphi 0, %s225
    $region4: #{tpu_custom_call.1} parent=1 // loop_header_branch
      %26 = sbr.rel (%p24) target = $region8
    $region5: #{tpu_custom_call.1} parent=1 // loop_body
      %s28 = ssub.s32 %s23, 1
      %s29 = ssub.s32 %s23, 2
      %s30 = sadd.s32 %s23, 1
      %s31 = ssub.s32 %s23, %s30
      %p32 = scmp.eq.s32.totalorder %s31, 0
      %s34 = sadd.s32 %s33, 1
      %s35 = scalar_select %p32, %s33, %s34
      %p38 = pneg %p32
      %p39 = scmp.eq.s32.totalorder %s23, 3
      %p40 = por %p38, %p39
      %p41 = scmp.ne.s32.totalorder %s33, %s36
      %p42 = scmp.eq.s32.totalorder %s23, 0
      %p43 = por %p41, %p42
      %p44 = scmp.ne.s32.totalorder %s33, %s36
      %p45 = scmp.eq.s32.totalorder %s28, 3
      %p46 = por %p44, %p45
      %p47 = scmp.ne.s32.totalorder %s36, %s37
      %p48 = scmp.eq.s32.totalorder %s28, 0
      %p49 = por %p47, %p48
      %p50 = scmp.ne.s32.totalorder %s36, %s37
      %p51 = scmp.eq.s32.totalorder %s29, 3
      %p52 = por %p50, %p51
      %p54 = scmp.ne.s32.totalorder %s37, %s53
      %p55 = scmp.eq.s32.totalorder %s29, 0
      %p56 = por %p54, %p55
      %s57 = ssub.s32 %s23, %s30
      %p58 = scmp.eq.s32.totalorder %s57, 0
      %s60 = sadd.s32 %s59, 1
      %s61 = scalar_select %p58, %s59, %s60
      %p64 = pneg %p58
      %p65 = scmp.eq.s32.totalorder %s23, 3
      %p66 = por %p64, %p65
      %p67 = scmp.ne.s32.totalorder %s59, %s62
      %p68 = scmp.eq.s32.totalorder %s23, 0
      %p69 = por %p67, %p68
      %p70 = scmp.ne.s32.totalorder %s59, %s62
      %p71 = scmp.eq.s32.totalorder %s28, 3
      %p72 = por %p70, %p71
      %p73 = scmp.ne.s32.totalorder %s62, %s63
      %p74 = scmp.eq.s32.totalorder %s28, 0
      %p75 = por %p73, %p74
      %p76 = scmp.ne.s32.totalorder %s62, %s63
      %p77 = scmp.eq.s32.totalorder %s29, 3
      %p78 = por %p76, %p77
      %p80 = scmp.ne.s32.totalorder %s63, %s79
      %p81 = scmp.eq.s32.totalorder %s29, 0
      %p82 = por %p80, %p81
      %s83 = ssub.s32 %s23, %s30
      %p84 = scmp.eq.s32.totalorder %s83, 0
      %s86 = sadd.s32 %s85, 1
      %s87 = scalar_select %p84, %s85, %s86
      %p90 = pneg %p84
      %p91 = scmp.eq.s32.totalorder %s23, 3
      %p92 = por %p90, %p91
      %p93 = scmp.ne.s32.totalorder %s85, %s88
      %p94 = scmp.eq.s32.totalorder %s23, 0
      %p95 = por %p93, %p94
      %p96 = scmp.ne.s32.totalorder %s85, %s88
      %p97 = scmp.eq.s32.totalorder %s28, 3
      %p98 = por %p96, %p97
      %p99 = scmp.ne.s32.totalorder %s88, %s89
      %p100 = scmp.eq.s32.totalorder %s28, 0
      %p101 = por %p99, %p100
      %p102 = scmp.ne.s32.totalorder %s88, %s89
      %p103 = scmp.eq.s32.totalorder %s29, 3
      %p104 = por %p102, %p103
      %p106 = scmp.ne.s32.totalorder %s89, %s105
      %p107 = scmp.eq.s32.totalorder %s29, 0
      %p108 = por %p106, %p107
      %s109 = ssub.s32 %s23, %s30
      %p110 = scmp.eq.s32.totalorder %s109, 0
      %s112 = sadd.s32 %s111, 1
      %s113 = scalar_select %p110, %s111, %s112
      %p116 = pneg %p110
      %p117 = scmp.eq.s32.totalorder %s23, 3
      %p118 = por %p116, %p117
      %p119 = scmp.ne.s32.totalorder %s111, %s114
      %p120 = scmp.eq.s32.totalorder %s23, 0
      %p121 = por %p119, %p120
      %p122 = scmp.ne.s32.totalorder %s111, %s114
      %p123 = scmp.eq.s32.totalorder %s28, 3
      %p124 = por %p122, %p123
      %p125 = scmp.ne.s32.totalorder %s114, %s115
      %p126 = scmp.eq.s32.totalorder %s28, 0
      %p127 = por %p125, %p126
      %p128 = scmp.ne.s32.totalorder %s114, %s115
      %p129 = scmp.eq.s32.totalorder %s29, 3
      %p130 = por %p128, %p129
      %p132 = scmp.ne.s32.totalorder %s115, %s131
      %p133 = scmp.eq.s32.totalorder %s29, 0
      %p134 = por %p132, %p133
      %s136 = sadd.s32 %s135, 1
      %p139 = scmp.eq.s32.totalorder %s23, 3
      %p140 = scmp.ne.s32.totalorder %s135, %s137
      %p141 = scmp.eq.s32.totalorder %s23, 0
      %p142 = por %p140, %p141
      %p143 = scmp.ne.s32.totalorder %s135, %s137
      %p144 = scmp.eq.s32.totalorder %s28, 3
      %p145 = por %p143, %p144
      %p146 = scmp.ne.s32.totalorder %s137, %s138
      %p147 = scmp.eq.s32.totalorder %s28, 0
      %p148 = por %p146, %p147
      %p149 = scmp.ne.s32.totalorder %s137, %s138
      %p150 = scmp.eq.s32.totalorder %s29, 3
      %p151 = por %p149, %p150
      %p153 = scmp.ne.s32.totalorder %s138, %s152
      %p154 = scmp.eq.s32.totalorder %s29, 0
      %p155 = por %p153, %p154
      %s157 = sadd.s32 %s156, 1
      %p160 = scmp.eq.s32.totalorder %s23, 3
      %p161 = scmp.ne.s32.totalorder %s156, %s158
      %p162 = scmp.eq.s32.totalorder %s23, 0
      %p163 = por %p161, %p162
      %p164 = scmp.ne.s32.totalorder %s156, %s158
      %p165 = scmp.eq.s32.totalorder %s28, 3
      %p166 = por %p164, %p165
      %p167 = scmp.ne.s32.totalorder %s158, %s159
      %p168 = scmp.eq.s32.totalorder %s28, 0
      %p169 = por %p167, %p168
      %p170 = scmp.ne.s32.totalorder %s158, %s159
      %p171 = scmp.eq.s32.totalorder %s29, 3
      %p172 = por %p170, %p171
      %p174 = scmp.ne.s32.totalorder %s159, %s173
      %p175 = scmp.eq.s32.totalorder %s29, 0
      %p176 = por %p174, %p175
      %s178 = sadd.s32 %s177, 1
      %p181 = scmp.eq.s32.totalorder %s23, 3
      %p182 = scmp.ne.s32.totalorder %s177, %s179
      %p183 = scmp.eq.s32.totalorder %s23, 0
      %p184 = por %p182, %p183
      %p185 = scmp.ne.s32.totalorder %s177, %s179
      %p186 = scmp.eq.s32.totalorder %s28, 3
      %p187 = por %p185, %p186
      %p188 = scmp.ne.s32.totalorder %s179, %s180
      %p189 = scmp.eq.s32.totalorder %s28, 0
      %p190 = por %p188, %p189
      %p191 = scmp.ne.s32.totalorder %s179, %s180
      %p192 = scmp.eq.s32.totalorder %s29, 3
      %p193 = por %p191, %p192
      %p195 = scmp.ne.s32.totalorder %s180, %s194
      %p196 = scmp.eq.s32.totalorder %s29, 0
      %p197 = por %p195, %p196
      %s199 = sadd.s32 %s198, 1
      %p202 = scmp.eq.s32.totalorder %s23, 3
      %p203 = scmp.ne.s32.totalorder %s198, %s200
      %p204 = scmp.eq.s32.totalorder %s23, 0
      %p205 = por %p203, %p204
      %p206 = scmp.ne.s32.totalorder %s198, %s200
      %p207 = scmp.eq.s32.totalorder %s28, 3
      %p208 = por %p206, %p207
      %p209 = scmp.ne.s32.totalorder %s200, %s201
      %p210 = scmp.eq.s32.totalorder %s28, 0
      %p211 = por %p209, %p210
      %p212 = scmp.ne.s32.totalorder %s200, %s201
      %p213 = scmp.eq.s32.totalorder %s29, 3
      %p214 = por %p212, %p213
      %p216 = scmp.ne.s32.totalorder %s201, %s215
      %p217 = scmp.eq.s32.totalorder %s29, 0
      %p218 = por %p216, %p217
      %s219 = ssub.s32 %s23, %s30
      %p220 = scmp.eq.s32.totalorder %s219, 0
      %s222 = sadd.s32 %s221, 1
      %s223 = scalar_select %p220, %s221, %s222
      %p226 = pneg %p220
      %p227 = scmp.eq.s32.totalorder %s23, 3
      %p228 = por %p226, %p227
      %p229 = scmp.ne.s32.totalorder %s221, %s224
      %p230 = scmp.eq.s32.totalorder %s23, 0
      %p231 = por %p229, %p230
      %p232 = scmp.ne.s32.totalorder %s221, %s224
      %p233 = scmp.eq.s32.totalorder %s28, 3
      %p234 = por %p232, %p233
      %p235 = scmp.ne.s32.totalorder %s224, %s225
      %p236 = scmp.eq.s32.totalorder %s28, 0
      %p237 = por %p235, %p236
      %p238 = scmp.ne.s32.totalorder %s224, %s225
      %p239 = scmp.eq.s32.totalorder %s29, 3
      %p240 = por %p238, %p239
      %p242 = scmp.ne.s32.totalorder %s225, %s241
      %p243 = scmp.eq.s32.totalorder %s29, 0
      %p244 = por %p242, %p243
      %p245 = scmp.le.s32.totalorder 1, %s23
      %p246 = scmp.lt.s32.totalorder %s23, 5
      %p247 = pnand %p245, %p246
      %p248 = pneg %p247
      // Predicated region
      $region9: #{tpu_custom_call.1} parent=5 // pred_check
        _
      $region10: #{tpu_custom_call.1} parent=5 // pred_check_branch
        %250 = sbr.rel (%p247) target = $region12
      $region11: #{tpu_custom_call.1} parent=5 // pred_region
        %s251 = ssub.s32 %s23, 1
        // Predicated region
        $region13: #{tpu_custom_call.1} parent=11 // pred_check
          %p252 = pneg %p148
        $region14: #{tpu_custom_call.1} parent=11 // pred_check_branch
          %254 = sbr.rel (%p252) target = $region16
        $region15: #{tpu_custom_call.1} parent=11 // pred_region
          _
        $region16: #{tpu_custom_call.1} parent=11 // pred_fallthru
          _
        // Predicated region
        $region17: #{tpu_custom_call.1} parent=11 // pred_check
          %p255 = pneg %p169
        $region18: #{tpu_custom_call.1} parent=11 // pred_check_branch
          %257 = sbr.rel (%p255) target = $region20
        $region19: #{tpu_custom_call.1} parent=11 // pred_region
          _
        $region20: #{tpu_custom_call.1} parent=11 // pred_fallthru
          _
        // Predicated region
        $region21: #{tpu_custom_call.1} parent=11 // pred_check
          %p258 = pneg %p190
        $region22: #{tpu_custom_call.1} parent=11 // pred_check_branch
          %260 = sbr.rel (%p258) target = $region24
        $region23: #{tpu_custom_call.1} parent=11 // pred_region
          _
        $region24: #{tpu_custom_call.1} parent=11 // pred_fallthru
          _
        // Predicated region
        $region25: #{tpu_custom_call.1} parent=11 // pred_check
          %p261 = pneg %p211
        $region26: #{tpu_custom_call.1} parent=11 // pred_check_branch
          %263 = sbr.rel (%p261) target = $region28
        $region27: #{tpu_custom_call.1} parent=11 // pred_region
          _
        $region28: #{tpu_custom_call.1} parent=11 // pred_fallthru
          _
      $region12: #{tpu_custom_call.1} parent=5 // pred_fallthru
        _
      %p264 = scmp.lt.s32.totalorder %s23, 4
      // Predicated region
      $region29: #{tpu_custom_call.1} parent=5 // pred_check
        %p265 = pneg %p264
      $region30: #{tpu_custom_call.1} parent=5 // pred_check_branch
        %267 = sbr.rel (%p265) target = $region32
      $region31: #{tpu_custom_call.1} parent=5 // pred_region
        // Predicated region
        $region33: #{tpu_custom_call.1} parent=31 // pred_check
          %p268 = pneg %p43
        $region34: #{tpu_custom_call.1} parent=31 // pred_check_branch
          %270 = sbr.rel (%p268) target = $region36
        $region35: #{tpu_custom_call.1} parent=31 // pred_region
          %s271 = sand.u32 %s33, 1
          %s272 = scalar_lea.sflag [#allocation3], %s271
          %s273 = sand.u32 %s33, 1
          %s274 = smul.addr %s273, 128
          %s275 = scalar_lea.vmem [#allocation2], %s274
          %s276 = smul.u32 8, %s23
          %s278 = ssub.s32 2048, 2048
          %279 = vsyncadd %s272, %s278
          %s280 = smul.addr %s276, 2
          %s281 = smul.addr %s280, 128
          %s282 = scalar_lea.hbm %s0, %s281
          %s283 = sshll.u32 %s275, 4
          %s284 = int_to_ptr.vmem [resolvable:$true] %s283
          %289 = dma.hbm_to_vmem [thread:$0]  %s282, 2048, %s284, %s272, 128, 128, 8
        $region36: #{tpu_custom_call.1} parent=31 // pred_fallthru
          _
        // Predicated region
        $region37: #{tpu_custom_call.1} parent=31 // pred_check
          %p290 = pneg %p69
        $region38: #{tpu_custom_call.1} parent=31 // pred_check_branch
          %292 = sbr.rel (%p290) target = $region40
        $region39: #{tpu_custom_call.1} parent=31 // pred_region
          %s293 = sand.u32 %s59, 1
          %s294 = scalar_lea.sflag [#allocation6], %s293
          %s295 = sand.u32 %s59, 1
          %s296 = smul.addr %s295, 128
          %s297 = scalar_lea.vmem [#allocation5], %s296
          %s298 = smul.u32 8, %s23
          %s300 = ssub.s32 2048, 2048
          %301 = vsyncadd %s294, %s300
          %s302 = smul.addr %s298, 2
          %s303 = smul.addr %s302, 128
          %s304 = scalar_lea.hbm %s1, %s303
          %s305 = sshll.u32 %s297, 4
          %s306 = int_to_ptr.vmem [resolvable:$true] %s305
          %311 = dma.hbm_to_vmem [thread:$0]  %s304, 2048, %s306, %s294, 128, 128, 8
        $region40: #{tpu_custom_call.1} parent=31 // pred_fallthru
          _
        // Predicated region
        $region41: #{tpu_custom_call.1} parent=31 // pred_check
          %p312 = pneg %p95
        $region42: #{tpu_custom_call.1} parent=31 // pred_check_branch
          %314 = sbr.rel (%p312) target = $region44
        $region43: #{tpu_custom_call.1} parent=31 // pred_region
          %p315 = scmp.lt.s32.totalorder %s23, 3
          %s316 = scalar_select %p315, %s23, 3
          %s317 = smul.addr %s316, 8
          %s318 = scalar_lea.vmem %s2, %s317
        $region44: #{tpu_custom_call.1} parent=31 // pred_fallthru
          _
        // Predicated region
        $region45: #{tpu_custom_call.1} parent=31 // pred_check
          %p319 = pneg %p121
        $region46: #{tpu_custom_call.1} parent=31 // pred_check_branch
          %321 = sbr.rel (%p319) target = $region48
        $region47: #{tpu_custom_call.1} parent=31 // pred_region
          %p322 = scmp.lt.s32.totalorder %s23, 3
          %s323 = scalar_select %p322, %s23, 3
          %s324 = smul.addr %s323, 8
          %s325 = scalar_lea.vmem %s3, %s324
        $region48: #{tpu_custom_call.1} parent=31 // pred_fallthru
          _
      $region32: #{tpu_custom_call.1} parent=5 // pred_fallthru
        _
      %p326 = scmp.le.s32.totalorder 1, %s23
      %p327 = scmp.lt.s32.totalorder %s23, 5
      %p328 = pnand %p326, %p327
      %p329 = pneg %p328
      // Predicated region
      $region49: #{tpu_custom_call.1} parent=5 // pred_check
        _
      $region50: #{tpu_custom_call.1} parent=5 // pred_check_branch
        %331 = sbr.rel (%p328) target = $region52
      $region51: #{tpu_custom_call.1} parent=5 // pred_region
        %s332 = ssub.s32 %s23, 1
        %s333 = sand.u32 %s36, 1
        %s334 = scalar_lea.sflag [#allocation3], %s333
        %s335 = sand.u32 %s36, 1
        %s336 = smul.addr %s335, 128
        %s337 = scalar_lea.vmem [#allocation2], %s336
        // Predicated region
        $region53: #{tpu_custom_call.1} parent=51 // pred_check
          %p338 = pneg %p49
        $region54: #{tpu_custom_call.1} parent=51 // pred_check_branch
          %340 = sbr.rel (%p338) target = $region56
        $region55: #{tpu_custom_call.1} parent=51 // pred_region
          %341 = dma.done %s334, 2048
        $region56: #{tpu_custom_call.1} parent=51 // pred_fallthru
          _
        %s342 = sand.u32 %s62, 1
        %s343 = scalar_lea.sflag [#allocation6], %s342
        %s344 = sand.u32 %s62, 1
        %s345 = smul.addr %s344, 128
        %s346 = scalar_lea.vmem [#allocation5], %s345
        // Predicated region
        $region57: #{tpu_custom_call.1} parent=51 // pred_check
          %p347 = pneg %p75
        $region58: #{tpu_custom_call.1} parent=51 // pred_check_branch
          %349 = sbr.rel (%p347) target = $region60
        $region59: #{tpu_custom_call.1} parent=51 // pred_region
          %350 = dma.done %s343, 2048
        $region60: #{tpu_custom_call.1} parent=51 // pred_fallthru
          _
        %s351 = sand.u32 %s36, 1
        %s352 = scalar_lea.sflag [#allocation3], %s351
        %s353 = sand.u32 %s36, 1
        %s354 = smul.addr %s353, 128
        %s355 = scalar_lea.vmem [#allocation2], %s354
        %p356 = pneg %p49
        %p357 = pneg %p46
        %s358 = sand.u32 %s62, 1
        %s359 = scalar_lea.sflag [#allocation6], %s358
        %s360 = sand.u32 %s62, 1
        %s361 = smul.addr %s360, 128
        %s362 = scalar_lea.vmem [#allocation5], %s361
        %p363 = pneg %p75
        %p364 = pneg %p72
        %p365 = scmp.lt.s32.totalorder %s28, 3
        %s366 = scalar_select %p365, %s28, 3
        %s367 = smul.addr %s366, 8
        %s368 = scalar_lea.vmem %s2, %s367
        %p369 = pneg %p101
        %p370 = pneg %p98
        %p371 = scmp.lt.s32.totalorder %s28, 3
        %s372 = scalar_select %p371, %s28, 3
        %s373 = smul.addr %s372, 8
        %s374 = scalar_lea.vmem %s3, %s373
        %p375 = pneg %p127
        %p376 = pneg %p124
        %p377 = pneg %p148
        %p378 = pneg %p145
        %p379 = pneg %p169
        %p380 = pneg %p166
        %p381 = pneg %p190
        %p382 = pneg %p187
        %p383 = pneg %p211
        %p384 = pneg %p208
        %p385 = pneg %p237
        %p386 = pneg %p234
        %s387 = sand.u32 %s224, 1
        %s388 = scalar_lea.sflag [#allocation4], %s387
        %s389 = sand.u32 %s224, 1
        %s390 = smul.addr %s389, 8
        %s391 = scalar_lea.vmem [#allocation7], %s390
        %s392 = smul.u32 8, %s28
        %s393 = smul.u32 8, %s28
        %p394 = scmp.lt.s32.totalorder %s28, 3
        %s395 = scalar_select %p394, %s28, 3
        %s396 = smul.addr %s395, 8
        %s397 = scalar_lea.vmem %s2, %s396
        %p398 = scmp.lt.s32.totalorder %s28, 3
        %s399 = scalar_select %p398, %s28, 3
        %s400 = smul.addr %s399, 8
        %s401 = scalar_lea.vmem %s3, %s400
        %v402 = vld [vmem:[%s7] sm:$0xff]
        %v403 = vld [vmem:[%s4] sm:$0xff]
        %v404 = vld [vmem:[%s4 + $0x8] sm:$0xff]
        %v405 = vld [vmem:[%s4 + $0x10] sm:$0xff]
        %v406 = vld [vmem:[%s4 + $0x18] sm:$0xff]
        %v407 = vld [vmem:[%s4 + $0x20] sm:$0xff]
        %v408 = vld [vmem:[%s4 + $0x28] sm:$0xff]
        %v409 = vld [vmem:[%s4 + $0x30] sm:$0xff]
        %v410 = vld [vmem:[%s4 + $0x38] sm:$0xff]
        %v411 = vld [vmem:[%s337] sm:$0xff]
        %v412 = vld [vmem:[%s337 + $0x8] sm:$0xff]
        %v413 = vld [vmem:[%s337 + $0x10] sm:$0xff]
        %v414 = vld [vmem:[%s337 + $0x18] sm:$0xff]
        %v415 = vld [vmem:[%s337 + $0x20] sm:$0xff]
        %v416 = vld [vmem:[%s337 + $0x28] sm:$0xff]
        %v417 = vld [vmem:[%s337 + $0x30] sm:$0xff]
        %v418 = vld [vmem:[%s337 + $0x38] sm:$0xff]
        %v419 = vld [vmem:[%s337 + $0x40] sm:$0xff]
        %v420 = vld [vmem:[%s337 + $0x48] sm:$0xff]
        %v421 = vld [vmem:[%s337 + $0x50] sm:$0xff]
        %v422 = vld [vmem:[%s337 + $0x58] sm:$0xff]
        %v423 = vld [vmem:[%s337 + $0x60] sm:$0xff]
        %v424 = vld [vmem:[%s337 + $0x68] sm:$0xff]
        %v425 = vld [vmem:[%s337 + $0x70] sm:$0xff]
        %v426 = vld [vmem:[%s337 + $0x78] sm:$0xff]
        %v427 = vld [vmem:[%s346] sm:$0xff]
        %v428 = vld [vmem:[%s346 + $0x8] sm:$0xff]
        %v429 = vld [vmem:[%s346 + $0x10] sm:$0xff]
        %v430 = vld [vmem:[%s346 + $0x18] sm:$0xff]
        %v431 = vld [vmem:[%s346 + $0x20] sm:$0xff]
        %v432 = vld [vmem:[%s346 + $0x28] sm:$0xff]
        %v433 = vld [vmem:[%s346 + $0x30] sm:$0xff]
        %v434 = vld [vmem:[%s346 + $0x38] sm:$0xff]
        %v435 = vld [vmem:[%s346 + $0x40] sm:$0xff]
        %v436 = vld [vmem:[%s346 + $0x48] sm:$0xff]
        %v437 = vld [vmem:[%s346 + $0x50] sm:$0xff]
        %v438 = vld [vmem:[%s346 + $0x58] sm:$0xff]
        %v439 = vld [vmem:[%s346 + $0x60] sm:$0xff]
        %v440 = vld [vmem:[%s346 + $0x68] sm:$0xff]
        %v441 = vld [vmem:[%s346 + $0x70] sm:$0xff]
        %v442 = vld [vmem:[%s346 + $0x78] sm:$0xff]
        %vm443 = vcmask 261120
        %v445 = vsel %vm443, %v427, 0
        %v448 = vsel %vm443, %v428, 0
        %v451 = vsel %vm443, %v429, 0
        %v454 = vsel %vm443, %v430, 0
        %v457 = vsel %vm443, %v431, 0
        %v460 = vsel %vm443, %v432, 0
        %v463 = vsel %vm443, %v433, 0
        %v466 = vsel %vm443, %v434, 0
        %v469 = vsel %vm443, %v435, 0
        %v472 = vsel %vm443, %v436, 0
        %v475 = vsel %vm443, %v437, 0
        %v478 = vsel %vm443, %v438, 0
        %v481 = vsel %vm443, %v439, 0
        %v484 = vsel %vm443, %v440, 0
        %v487 = vsel %vm443, %v441, 0
        %v490 = vsel %vm443, %v442, 0
        %492 = vmatprep.subr.mxu0 0.0
        %493 = vmatpush1.msra.mxu0 %v407
        %494 = vmatprep.subr.mxu0 0.0
        %495 = vmatpush1.msra.mxu0 %v408
        %496 = vmatprep.subr.mxu0 0.0
        %497 = vmatpush1.msra.mxu0 %v409
        %498 = vmatprep.subr.mxu0 0.0
        %499 = vmatpush1.msra.mxu0 %v410
        %500 = vmatprep.subr.mxu0 0.0
        %501 = vmatpush1.msra.mxu0 0.0
        %502 = vmatprep.subr.mxu0 0.0
        %503 = vmatpush1.msra.mxu0 0.0
        %504 = vmatprep.subr.mxu0 0.0
        %505 = vmatpush1.msra.mxu0 0.0
        %506 = vmatprep.subr.mxu0 0.0
        %507 = vmatpush1.msra.mxu0 0.0
        %508 = vmatprep.subr.mxu0 0.0
        %509 = vmatpush1.msra.mxu0 0.0
        %510 = vmatprep.subr.mxu0 0.0
        %511 = vmatpush1.msra.mxu0 0.0
        %512 = vmatprep.subr.mxu0 0.0
        %513 = vmatpush1.msra.mxu0 0.0
        %514 = vmatprep.subr.mxu0 0.0
        %515 = vmatpush1.msra.mxu0 0.0
        %516 = vmatprep.subr.mxu0 0.0
        %517 = vmatpush1.msra.mxu0 0.0
        %518 = vmatprep.subr.mxu0 0.0
        %519 = vmatpush1.msra.mxu0 0.0
        %520 = vmatprep.subr.mxu0 0.0
        %521 = vmatpush1.msra.mxu0 0.0
        %522 = vmatprep.subr.mxu0 0.0
        %523 = vmatpush1.msra.mxu0 0.0
        %524 = vmatprep.subr.mxu0 0.0
        %525 = vmatpush1.msra.mxu0 0.0
        %526 = vmatprep.subr.mxu0 0.0
        %527 = vmatpush1.msra.mxu0 0.0
        %528 = vmatprep.subr.mxu0 0.0
        %529 = vmatpush1.msra.mxu0 0.0
        %530 = vmatprep.subr.mxu0 0.0
        %531 = vmatpush1.msra.mxu0 0.0
        %532 = vmatprep.subr.mxu0 0.0
        %533 = vmatpush1.msra.mxu0 0.0
        %534 = vmatprep.subr.mxu0 0.0
        %535 = vmatpush1.msra.mxu0 0.0
        %536 = vmatprep.subr.mxu0 0.0
        %537 = vmatpush1.msra.mxu0 0.0
        %538 = vmatprep.subr.mxu0 0.0
        %539 = vmatpush1.msra.mxu0 0.0
        %540 = vmatprep.subr.mxu0 0.0
        %541 = vmatpush1.msra.mxu0 0.0
        %542 = vmatprep.subr.mxu0 0.0
        %543 = vmatpush1.msra.mxu0 0.0
        %544 = vmatprep.subr.mxu0 0.0
        %545 = vmatpush1.msra.mxu0 0.0
        %546 = vmatprep.subr.mxu0 0.0
        %547 = vmatpush1.msra.mxu0 0.0
        %548 = vmatprep.subr.mxu0 0.0
        %549 = vmatpush1.msra.mxu0 0.0
        %550 = vmatprep.subr.mxu0 0.0
        %551 = vmatpush1.msra.mxu0 0.0
        %552 = vmatprep.subr.mxu0 0.0
        %553 = vmatpush1.msra.mxu0 0.0
        %554 = vmatprep.subr.mxu0 0.0
        %555 = vmatpush1.msra.mxu0 0.0
        %556 = vmatprep.mubr.f32.mxu0 0.0
        %557 = vmatmul.mubr.f32.gmra.mrb[0].mxu0 %v445
        %v558 = vpop.f32.mrb[0].mxu0
        %v559 = vadd.f32 0.0, %v558
        %v560 = vpop.f32.mrb[0].mxu0
        %561 = vmatprep.mubr.f32.mxu0 0.0
        %562 = vmatmul.mubr.f32.gmra.mrb[0].mxu0 %v448
        %v563 = vpop.f32.mrb[0].mxu0
        %v564 = vadd.f32 0.0, %v563
        %v565 = vpop.f32.mrb[0].mxu0
        %566 = vmatprep.mubr.f32.mxu0 0.0
        %567 = vmatmul.mubr.f32.gmra.mrb[0].mxu0 %v451
        %v568 = vpop.f32.mrb[0].mxu0
        %v569 = vadd.f32 0.0, %v568
        %v570 = vpop.f32.mrb[0].mxu0
        %571 = vmatprep.mubr.f32.mxu0 0.0
        %572 = vmatmul.mubr.f32.gmra.mrb[0].mxu0 %v454
        %v573 = vpop.f32.mrb[0].mxu0
        %v574 = vadd.f32 0.0, %v573
        %v575 = vpop.f32.mrb[0].mxu0
        %576 = vmatprep.mubr.f32.mxu0 0.0
        %577 = vmatmul.mubr.f32.gmra.mrb[0].mxu0 %v457
        %v578 = vpop.f32.mrb[0].mxu0
        %v579 = vadd.f32 0.0, %v578
        %v580 = vpop.f32.mrb[0].mxu0
        %581 = vmatprep.mubr.f32.mxu0 0.0
        %582 = vmatmul.mubr.f32.gmra.mrb[0].mxu0 %v460
        %v583 = vpop.f32.mrb[0].mxu0
        %v584 = vadd.f32 0.0, %v583
        %v585 = vpop.f32.mrb[0].mxu0
        %586 = vmatprep.mubr.f32.mxu0 0.0
        %587 = vmatmul.mubr.f32.gmra.mrb[0].mxu0 %v463
        %v588 = vpop.f32.mrb[0].mxu0
        %v589 = vadd.f32 0.0, %v588
        %v590 = vpop.f32.mrb[0].mxu0
        %591 = vmatprep.mubr.f32.mxu0 0.0
        %592 = vmatmul.mubr.f32.gmra.mrb[0].mxu0 %v466
        %v593 = vpop.f32.mrb[0].mxu0
        %v594 = vadd.f32 0.0, %v593
        %v595 = vpop.f32.mrb[0].mxu0
        %596 = vmatprep.mubr.f32.mxu0 0.0
        %597 = vmatmul.mubr.f32.gmra.mrb[0].mxu0 %v469
        %v598 = vpop.f32.mrb[0].mxu0
        %v599 = vadd.f32 0.0, %v598
        %v600 = vpop.f32.mrb[0].mxu0
        %601 = vmatprep.mubr.f32.mxu0 0.0
        %602 = vmatmul.mubr.f32.gmra.mrb[0].mxu0 %v472
        %v603 = vpop.f32.mrb[0].mxu0
        %v604 = vadd.f32 0.0, %v603
        %v605 = vpop.f32.mrb[0].mxu0
        %606 = vmatprep.mubr.f32.mxu0 0.0
        %607 = vmatmul.mubr.f32.gmra.mrb[0].mxu0 %v475
        %v608 = vpop.f32.mrb[0].mxu0
        %v609 = vadd.f32 0.0, %v608
        %v610 = vpop.f32.mrb[0].mxu0
        %611 = vmatprep.mubr.f32.mxu0 0.0
        %612 = vmatmul.mubr.f32.gmra.mrb[0].mxu0 %v478
        %v613 = vpop.f32.mrb[0].mxu0
        %v614 = vadd.f32 0.0, %v613
        %v615 = vpop.f32.mrb[0].mxu0
        %616 = vmatprep.mubr.f32.mxu0 0.0
        %617 = vmatmul.mubr.f32.gmra.mrb[0].mxu0 %v481
        %v618 = vpop.f32.mrb[0].mxu0
        %v619 = vadd.f32 0.0, %v618
        %v620 = vpop.f32.mrb[0].mxu0
        %621 = vmatprep.mubr.f32.mxu0 0.0
        %622 = vmatmul.mubr.f32.gmra.mrb[0].mxu0 %v484
        %v623 = vpop.f32.mrb[0].mxu0
        %v624 = vadd.f32 0.0, %v623
        %v625 = vpop.f32.mrb[0].mxu0
        %626 = vmatprep.mubr.f32.mxu0 0.0
        %627 = vmatmul.mubr.f32.gmra.mrb[0].mxu0 %v487
        %v628 = vpop.f32.mrb[0].mxu0
        %v629 = vadd.f32 0.0, %v628
        %v630 = vpop.f32.mrb[0].mxu0
        %631 = vmatprep.mubr.f32.mxu0 0.0
        %632 = vmatmul.mubr.f32.gmra.mrb[0].mxu0 %v490
        %v633 = vpop.f32.mrb[0].mxu0
        %v634 = vadd.f32 0.0, %v633
        %v635 = vpop.f32.mrb[0].mxu0
        %636 = vdwg.mxu0
        %v638 = vsel %vm443, %v411, 0
        %v641 = vsel %vm443, %v412, 0
        %v644 = vsel %vm443, %v413, 0
        %v647 = vsel %vm443, %v414, 0
        %v650 = vsel %vm443, %v415, 0
        %v653 = vsel %vm443, %v416, 0
        %v656 = vsel %vm443, %v417, 0
        %v659 = vsel %vm443, %v418, 0
        %v662 = vsel %vm443, %v419, 0
        %v665 = vsel %vm443, %v420, 0
        %v668 = vsel %vm443, %v421, 0
        %v671 = vsel %vm443, %v422, 0
        %v674 = vsel %vm443, %v423, 0
        %v677 = vsel %vm443, %v424, 0
        %v680 = vsel %vm443, %v425, 0
        %v683 = vsel %vm443, %v426, 0
        %685 = vmatprep.subr.mxu0 0.0
        %686 = vmatpush1.msra.mxu0 %v403
        %687 = vmatprep.subr.mxu0 0.0
        %688 = vmatpush1.msra.mxu0 %v404
        %689 = vmatprep.subr.mxu0 0.0
        %690 = vmatpush1.msra.mxu0 %v405
        %691 = vmatprep.subr.mxu0 0.0
        %692 = vmatpush1.msra.mxu0 %v406
        %693 = vmatprep.subr.mxu0 0.0
        %694 = vmatpush1.msra.mxu0 0.0
        %695 = vmatprep.subr.mxu0 0.0
        %696 = vmatpush1.msra.mxu0 0.0
        %697 = vmatprep.subr.mxu0 0.0
        %698 = vmatpush1.msra.mxu0 0.0
        %699 = vmatprep.subr.mxu0 0.0
        %700 = vmatpush1.msra.mxu0 0.0
        %701 = vmatprep.subr.mxu0 0.0
        %702 = vmatpush1.msra.mxu0 0.0
        %703 = vmatprep.subr.mxu0 0.0
        %704 = vmatpush1.msra.mxu0 0.0
        %705 = vmatprep.subr.mxu0 0.0
        %706 = vmatpush1.msra.mxu0 0.0
        %707 = vmatprep.subr.mxu0 0.0
        %708 = vmatpush1.msra.mxu0 0.0
        %709 = vmatprep.subr.mxu0 0.0
        %710 = vmatpush1.msra.mxu0 0.0
        %711 = vmatprep.subr.mxu0 0.0
        %712 = vmatpush1.msra.mxu0 0.0
        %713 = vmatprep.subr.mxu0 0.0
        %714 = vmatpush1.msra.mxu0 0.0
        %715 = vmatprep.subr.mxu0 0.0
        %716 = vmatpush1.msra.mxu0 0.0
        %717 = vmatprep.subr.mxu0 0.0
        %718 = vmatpush1.msra.mxu0 0.0
        %719 = vmatprep.subr.mxu0 0.0
        %720 = vmatpush1.msra.mxu0 0.0
        %721 = vmatprep.subr.mxu0 0.0
        %722 = vmatpush1.msra.mxu0 0.0
        %723 = vmatprep.subr.mxu0 0.0
        %724 = vmatpush1.msra.mxu0 0.0
        %725 = vmatprep.subr.mxu0 0.0
        %726 = vmatpush1.msra.mxu0 0.0
        %727 = vmatprep.subr.mxu0 0.0
        %728 = vmatpush1.msra.mxu0 0.0
        %729 = vmatprep.subr.mxu0 0.0
        %730 = vmatpush1.msra.mxu0 0.0
        %731 = vmatprep.subr.mxu0 0.0
        %732 = vmatpush1.msra.mxu0 0.0
        %733 = vmatprep.subr.mxu0 0.0
        %734 = vmatpush1.msra.mxu0 0.0
        %735 = vmatprep.subr.mxu0 0.0
        %736 = vmatpush1.msra.mxu0 0.0
        %737 = vmatprep.subr.mxu0 0.0
        %738 = vmatpush1.msra.mxu0 0.0
        %739 = vmatprep.subr.mxu0 0.0
        %740 = vmatpush1.msra.mxu0 0.0
        %741 = vmatprep.subr.mxu0 0.0
        %742 = vmatpush1.msra.mxu0 0.0
        %743 = vmatprep.subr.mxu0 0.0
        %744 = vmatpush1.msra.mxu0 0.0
        %745 = vmatprep.subr.mxu0 0.0
        %746 = vmatpush1.msra.mxu0 0.0
        %747 = vmatprep.subr.mxu0 0.0
        %748 = vmatpush1.msra.mxu0 0.0
        %749 = vmatprep.mubr.f32.mxu0 0.0
        %750 = vmatmul.mubr.f32.gmra.mrb[0].mxu0 %v638
        %v751 = vpop.f32.mrb[0].mxu0
        %v752 = vadd.f32 %v559, %v751
        %v753 = vpop.f32.mrb[0].mxu0
        %754 = vmatprep.mubr.f32.mxu0 0.0
        %755 = vmatmul.mubr.f32.gmra.mrb[0].mxu0 %v641
        %v756 = vpop.f32.mrb[0].mxu0
        %v757 = vadd.f32 %v564, %v756
        %v758 = vpop.f32.mrb[0].mxu0
        %759 = vmatprep.mubr.f32.mxu0 0.0
        %760 = vmatmul.mubr.f32.gmra.mrb[0].mxu0 %v644
        %v761 = vpop.f32.mrb[0].mxu0
        %v762 = vadd.f32 %v569, %v761
        %v763 = vpop.f32.mrb[0].mxu0
        %764 = vmatprep.mubr.f32.mxu0 0.0
        %765 = vmatmul.mubr.f32.gmra.mrb[0].mxu0 %v647
        %v766 = vpop.f32.mrb[0].mxu0
        %v767 = vadd.f32 %v574, %v766
        %v768 = vpop.f32.mrb[0].mxu0
        %769 = vmatprep.mubr.f32.mxu0 0.0
        %770 = vmatmul.mubr.f32.gmra.mrb[0].mxu0 %v650
        %v771 = vpop.f32.mrb[0].mxu0
        %v772 = vadd.f32 %v579, %v771
        %v773 = vpop.f32.mrb[0].mxu0
        %774 = vmatprep.mubr.f32.mxu0 0.0
        %775 = vmatmul.mubr.f32.gmra.mrb[0].mxu0 %v653
        %v776 = vpop.f32.mrb[0].mxu0
        %v777 = vadd.f32 %v584, %v776
        %v778 = vpop.f32.mrb[0].mxu0
        %779 = vmatprep.mubr.f32.mxu0 0.0
        %780 = vmatmul.mubr.f32.gmra.mrb[0].mxu0 %v656
        %v781 = vpop.f32.mrb[0].mxu0
        %v782 = vadd.f32 %v589, %v781
        %v783 = vpop.f32.mrb[0].mxu0
        %784 = vmatprep.mubr.f32.mxu0 0.0
        %785 = vmatmul.mubr.f32.gmra.mrb[0].mxu0 %v659
        %v786 = vpop.f32.mrb[0].mxu0
        %v787 = vadd.f32 %v594, %v786
        %v788 = vpop.f32.mrb[0].mxu0
        %789 = vmatprep.mubr.f32.mxu0 0.0
        %790 = vmatmul.mubr.f32.gmra.mrb[0].mxu0 %v662
        %v791 = vpop.f32.mrb[0].mxu0
        %v792 = vadd.f32 %v599, %v791
        %v793 = vpop.f32.mrb[0].mxu0
        %794 = vmatprep.mubr.f32.mxu0 0.0
        %795 = vmatmul.mubr.f32.gmra.mrb[0].mxu0 %v665
        %v796 = vpop.f32.mrb[0].mxu0
        %v797 = vadd.f32 %v604, %v796
        %v798 = vpop.f32.mrb[0].mxu0
        %799 = vmatprep.mubr.f32.mxu0 0.0
        %800 = vmatmul.mubr.f32.gmra.mrb[0].mxu0 %v668
        %v801 = vpop.f32.mrb[0].mxu0
        %v802 = vadd.f32 %v609, %v801
        %v803 = vpop.f32.mrb[0].mxu0
        %804 = vmatprep.mubr.f32.mxu0 0.0
        %805 = vmatmul.mubr.f32.gmra.mrb[0].mxu0 %v671
        %v806 = vpop.f32.mrb[0].mxu0
        %v807 = vadd.f32 %v614, %v806
        %v808 = vpop.f32.mrb[0].mxu0
        %809 = vmatprep.mubr.f32.mxu0 0.0
        %810 = vmatmul.mubr.f32.gmra.mrb[0].mxu0 %v674
        %v811 = vpop.f32.mrb[0].mxu0
        %v812 = vadd.f32 %v619, %v811
        %v813 = vpop.f32.mrb[0].mxu0
        %814 = vmatprep.mubr.f32.mxu0 0.0
        %815 = vmatmul.mubr.f32.gmra.mrb[0].mxu0 %v677
        %v816 = vpop.f32.mrb[0].mxu0
        %v817 = vadd.f32 %v624, %v816
        %v818 = vpop.f32.mrb[0].mxu0
        %819 = vmatprep.mubr.f32.mxu0 0.0
        %820 = vmatmul.mubr.f32.gmra.mrb[0].mxu0 %v680
        %v821 = vpop.f32.mrb[0].mxu0
        %v822 = vadd.f32 %v629, %v821
        %v823 = vpop.f32.mrb[0].mxu0
        %824 = vmatprep.mubr.f32.mxu0 0.0
        %825 = vmatmul.mubr.f32.gmra.mrb[0].mxu0 %v683
        %v826 = vpop.f32.mrb[0].mxu0
        %v827 = vadd.f32 %v634, %v826
        %v828 = vpop.f32.mrb[0].mxu0
        %829 = vdwg.mxu0
        %v830 = vlaneseq
        %v831 = vshrl.u32 %v830, 7
        %v832 = vsub.s32 0, %v831
        %v833 = vrot.slane %v402, %v832
        %v834 = vadd.f32 %v752, %v833
        %v835 = vadd.f32 %v757, %v833
        %v836 = vadd.f32 %v762, %v833
        %v837 = vadd.f32 %v767, %v833
        %v838 = vadd.f32 %v772, %v833
        %v839 = vadd.f32 %v777, %v833
        %v840 = vadd.f32 %v782, %v833
        %v841 = vadd.f32 %v787, %v833
        %v842 = vadd.f32 %v792, %v833
        %v843 = vadd.f32 %v797, %v833
        %v844 = vadd.f32 %v802, %v833
        %v845 = vadd.f32 %v807, %v833
        %v846 = vadd.f32 %v812, %v833
        %v847 = vadd.f32 %v817, %v833
        %v848 = vadd.f32 %v822, %v833
        %v849 = vadd.f32 %v827, %v833
        %vm850 = vcmp.ge.f32.partialorder %v834, 0.0
        %vm851 = vcmp.ge.f32.partialorder %v835, 0.0
        %vm852 = vcmp.ge.f32.partialorder %v836, 0.0
        %vm853 = vcmp.ge.f32.partialorder %v837, 0.0
        %vm854 = vcmp.ge.f32.partialorder %v838, 0.0
        %vm855 = vcmp.ge.f32.partialorder %v839, 0.0
        %vm856 = vcmp.ge.f32.partialorder %v840, 0.0
        %vm857 = vcmp.ge.f32.partialorder %v841, 0.0
        %vm858 = vcmp.ge.f32.partialorder %v842, 0.0
        %vm859 = vcmp.ge.f32.partialorder %v843, 0.0
        %vm860 = vcmp.ge.f32.partialorder %v844, 0.0
        %vm861 = vcmp.ge.f32.partialorder %v845, 0.0
        %vm862 = vcmp.ge.f32.partialorder %v846, 0.0
        %vm863 = vcmp.ge.f32.partialorder %v847, 0.0
        %vm864 = vcmp.ge.f32.partialorder %v848, 0.0
        %vm865 = vcmp.ge.f32.partialorder %v849, 0.0
        %v866 = vmul.f32 %v834, 0.2
        %v867 = vmul.f32 %v835, 0.2
        %v868 = vmul.f32 %v836, 0.2
        %v869 = vmul.f32 %v837, 0.2
        %v870 = vmul.f32 %v838, 0.2
        %v871 = vmul.f32 %v839, 0.2
        %v872 = vmul.f32 %v840, 0.2
        %v873 = vmul.f32 %v841, 0.2
        %v874 = vmul.f32 %v842, 0.2
        %v875 = vmul.f32 %v843, 0.2
        %v876 = vmul.f32 %v844, 0.2
        %v877 = vmul.f32 %v845, 0.2
        %v878 = vmul.f32 %v846, 0.2
        %v879 = vmul.f32 %v847, 0.2
        %v880 = vmul.f32 %v848, 0.2
        %v881 = vmul.f32 %v849, 0.2
        %v882 = vsel %vm850, %v834, %v866
        %v883 = vsel %vm851, %v835, %v867
        %v884 = vsel %vm852, %v836, %v868
        %v885 = vsel %vm853, %v837, %v869
        %v886 = vsel %vm854, %v838, %v870
        %v887 = vsel %vm855, %v839, %v871
        %v888 = vsel %vm856, %v840, %v872
        %v889 = vsel %vm857, %v841, %v873
        %v890 = vsel %vm858, %v842, %v874
        %v891 = vsel %vm859, %v843, %v875
        %v892 = vsel %vm860, %v844, %v876
        %v893 = vsel %vm861, %v845, %v877
        %v894 = vsel %vm862, %v846, %v878
        %v895 = vsel %vm863, %v847, %v879
        %v896 = vsel %vm864, %v848, %v880
        %v897 = vsel %vm865, %v849, %v881
        %v898 = vld [vmem:[%s5] sm:$0xff]
        %v899 = vld [vmem:[%s5 + $0x8] sm:$0xff]
        %v900 = vld [vmem:[%s5 + $0x10] sm:$0xff]
        %v901 = vld [vmem:[%s5 + $0x18] sm:$0xff]
        %v903 = vsel %vm443, %v882, 0
        %v906 = vsel %vm443, %v883, 0
        %v909 = vsel %vm443, %v884, 0
        %v912 = vsel %vm443, %v885, 0
        %v915 = vsel %vm443, %v886, 0
        %v918 = vsel %vm443, %v887, 0
        %v921 = vsel %vm443, %v888, 0
        %v924 = vsel %vm443, %v889, 0
        %v927 = vsel %vm443, %v890, 0
        %v930 = vsel %vm443, %v891, 0
        %v933 = vsel %vm443, %v892, 0
        %v936 = vsel %vm443, %v893, 0
        %v939 = vsel %vm443, %v894, 0
        %v942 = vsel %vm443, %v895, 0
        %v945 = vsel %vm443, %v896, 0
        %v948 = vsel %vm443, %v897, 0
        %950 = vmatprep.subr.mxu0 0.0
        %951 = vmatpush1.msra.mxu0 %v898
        %952 = vmatprep.subr.mxu0 0.0
        %953 = vmatpush1.msra.mxu0 %v899
        %954 = vmatprep.subr.mxu0 0.0
        %955 = vmatpush1.msra.mxu0 %v900
        %956 = vmatprep.subr.mxu0 0.0
        %957 = vmatpush1.msra.mxu0 %v901
        %958 = vmatprep.subr.mxu0 0.0
        %959 = vmatpush1.msra.mxu0 0.0
        %960 = vmatprep.subr.mxu0 0.0
        %961 = vmatpush1.msra.mxu0 0.0
        %962 = vmatprep.subr.mxu0 0.0
        %963 = vmatpush1.msra.mxu0 0.0
        %964 = vmatprep.subr.mxu0 0.0
        %965 = vmatpush1.msra.mxu0 0.0
        %966 = vmatprep.subr.mxu0 0.0
        %967 = vmatpush1.msra.mxu0 0.0
        %968 = vmatprep.subr.mxu0 0.0
        %969 = vmatpush1.msra.mxu0 0.0
        %970 = vmatprep.subr.mxu0 0.0
        %971 = vmatpush1.msra.mxu0 0.0
        %972 = vmatprep.subr.mxu0 0.0
        %973 = vmatpush1.msra.mxu0 0.0
        %974 = vmatprep.subr.mxu0 0.0
        %975 = vmatpush1.msra.mxu0 0.0
        %976 = vmatprep.subr.mxu0 0.0
        %977 = vmatpush1.msra.mxu0 0.0
        %978 = vmatprep.subr.mxu0 0.0
        %979 = vmatpush1.msra.mxu0 0.0
        %980 = vmatprep.subr.mxu0 0.0
        %981 = vmatpush1.msra.mxu0 0.0
        %982 = vmatprep.subr.mxu0 0.0
        %983 = vmatpush1.msra.mxu0 0.0
        %984 = vmatprep.subr.mxu0 0.0
        %985 = vmatpush1.msra.mxu0 0.0
        %986 = vmatprep.subr.mxu0 0.0
        %987 = vmatpush1.msra.mxu0 0.0
        %988 = vmatprep.subr.mxu0 0.0
        %989 = vmatpush1.msra.mxu0 0.0
        %990 = vmatprep.subr.mxu0 0.0
        %991 = vmatpush1.msra.mxu0 0.0
        %992 = vmatprep.subr.mxu0 0.0
        %993 = vmatpush1.msra.mxu0 0.0
        %994 = vmatprep.subr.mxu0 0.0
        %995 = vmatpush1.msra.mxu0 0.0
        %996 = vmatprep.subr.mxu0 0.0
        %997 = vmatpush1.msra.mxu0 0.0
        %998 = vmatprep.subr.mxu0 0.0
        %999 = vmatpush1.msra.mxu0 0.0
        %1000 = vmatprep.subr.mxu0 0.0
        %1001 = vmatpush1.msra.mxu0 0.0
        %1002 = vmatprep.subr.mxu0 0.0
        %1003 = vmatpush1.msra.mxu0 0.0
        %1004 = vmatprep.subr.mxu0 0.0
        %1005 = vmatpush1.msra.mxu0 0.0
        %1006 = vmatprep.subr.mxu0 0.0
        %1007 = vmatpush1.msra.mxu0 0.0
        %1008 = vmatprep.subr.mxu0 0.0
        %1009 = vmatpush1.msra.mxu0 0.0
        %1010 = vmatprep.subr.mxu0 0.0
        %1011 = vmatpush1.msra.mxu0 0.0
        %1012 = vmatprep.subr.mxu0 0.0
        %1013 = vmatpush1.msra.mxu0 0.0
        %1014 = vmatprep.mubr.f32.mxu0 0.0
        %1015 = vmatmul.mubr.f32.gmra.mrb[0].mxu0 %v903
        %v1016 = vpop.f32.mrb[0].mxu0
        %v1017 = vadd.f32 0.0, %v1016
        %v1018 = vpop.f32.mrb[0].mxu0
        %1019 = vmatprep.mubr.f32.mxu0 0.0
        %1020 = vmatmul.mubr.f32.gmra.mrb[0].mxu0 %v906
        %v1021 = vpop.f32.mrb[0].mxu0
        %v1022 = vadd.f32 0.0, %v1021
        %v1023 = vpop.f32.mrb[0].mxu0
        %1024 = vmatprep.mubr.f32.mxu0 0.0
        %1025 = vmatmul.mubr.f32.gmra.mrb[0].mxu0 %v909
        %v1026 = vpop.f32.mrb[0].mxu0
        %v1027 = vadd.f32 0.0, %v1026
        %v1028 = vpop.f32.mrb[0].mxu0
        %1029 = vmatprep.mubr.f32.mxu0 0.0
        %1030 = vmatmul.mubr.f32.gmra.mrb[0].mxu0 %v912
        %v1031 = vpop.f32.mrb[0].mxu0
        %v1032 = vadd.f32 0.0, %v1031
        %v1033 = vpop.f32.mrb[0].mxu0
        %1034 = vmatprep.mubr.f32.mxu0 0.0
        %1035 = vmatmul.mubr.f32.gmra.mrb[0].mxu0 %v915
        %v1036 = vpop.f32.mrb[0].mxu0
        %v1037 = vadd.f32 0.0, %v1036
        %v1038 = vpop.f32.mrb[0].mxu0
        %1039 = vmatprep.mubr.f32.mxu0 0.0
        %1040 = vmatmul.mubr.f32.gmra.mrb[0].mxu0 %v918
        %v1041 = vpop.f32.mrb[0].mxu0
        %v1042 = vadd.f32 0.0, %v1041
        %v1043 = vpop.f32.mrb[0].mxu0
        %1044 = vmatprep.mubr.f32.mxu0 0.0
        %1045 = vmatmul.mubr.f32.gmra.mrb[0].mxu0 %v921
        %v1046 = vpop.f32.mrb[0].mxu0
        %v1047 = vadd.f32 0.0, %v1046
        %v1048 = vpop.f32.mrb[0].mxu0
        %1049 = vmatprep.mubr.f32.mxu0 0.0
        %1050 = vmatmul.mubr.f32.gmra.mrb[0].mxu0 %v924
        %v1051 = vpop.f32.mrb[0].mxu0
        %v1052 = vadd.f32 0.0, %v1051
        %v1053 = vpop.f32.mrb[0].mxu0
        %1054 = vmatprep.mubr.f32.mxu0 0.0
        %1055 = vmatmul.mubr.f32.gmra.mrb[0].mxu0 %v927
        %v1056 = vpop.f32.mrb[0].mxu0
        %v1057 = vadd.f32 0.0, %v1056
        %v1058 = vpop.f32.mrb[0].mxu0
        %1059 = vmatprep.mubr.f32.mxu0 0.0
        %1060 = vmatmul.mubr.f32.gmra.mrb[0].mxu0 %v930
        %v1061 = vpop.f32.mrb[0].mxu0
        %v1062 = vadd.f32 0.0, %v1061
        %v1063 = vpop.f32.mrb[0].mxu0
        %1064 = vmatprep.mubr.f32.mxu0 0.0
        %1065 = vmatmul.mubr.f32.gmra.mrb[0].mxu0 %v933
        %v1066 = vpop.f32.mrb[0].mxu0
        %v1067 = vadd.f32 0.0, %v1066
        %v1068 = vpop.f32.mrb[0].mxu0
        %1069 = vmatprep.mubr.f32.mxu0 0.0
        %1070 = vmatmul.mubr.f32.gmra.mrb[0].mxu0 %v936
        %v1071 = vpop.f32.mrb[0].mxu0
        %v1072 = vadd.f32 0.0, %v1071
        %v1073 = vpop.f32.mrb[0].mxu0
        %1074 = vmatprep.mubr.f32.mxu0 0.0
        %1075 = vmatmul.mubr.f32.gmra.mrb[0].mxu0 %v939
        %v1076 = vpop.f32.mrb[0].mxu0
        %v1077 = vadd.f32 0.0, %v1076
        %v1078 = vpop.f32.mrb[0].mxu0
        %1079 = vmatprep.mubr.f32.mxu0 0.0
        %1080 = vmatmul.mubr.f32.gmra.mrb[0].mxu0 %v942
        %v1081 = vpop.f32.mrb[0].mxu0
        %v1082 = vadd.f32 0.0, %v1081
        %v1083 = vpop.f32.mrb[0].mxu0
        %1084 = vmatprep.mubr.f32.mxu0 0.0
        %1085 = vmatmul.mubr.f32.gmra.mrb[0].mxu0 %v945
        %v1086 = vpop.f32.mrb[0].mxu0
        %v1087 = vadd.f32 0.0, %v1086
        %v1088 = vpop.f32.mrb[0].mxu0
        %1089 = vmatprep.mubr.f32.mxu0 0.0
        %1090 = vmatmul.mubr.f32.gmra.mrb[0].mxu0 %v948
        %v1091 = vpop.f32.mrb[0].mxu0
        %v1092 = vadd.f32 0.0, %v1091
        %v1093 = vpop.f32.mrb[0].mxu0
        %1094 = vdwg.mxu0
        %v1095 = vlaneseq
        %v1096 = vshrl.u32 %v1095, 7
        %v1097 = vsub.s32 1, %v1096
        %v1098 = vrot.slane %v402, %v1097
        %v1099 = vadd.f32 %v1017, %v1098
        %v1100 = vadd.f32 %v1022, %v1098
        %v1101 = vadd.f32 %v1027, %v1098
        %v1102 = vadd.f32 %v1032, %v1098
        %v1103 = vadd.f32 %v1037, %v1098
        %v1104 = vadd.f32 %v1042, %v1098
        %v1105 = vadd.f32 %v1047, %v1098
        %v1106 = vadd.f32 %v1052, %v1098
        %v1107 = vadd.f32 %v1057, %v1098
        %v1108 = vadd.f32 %v1062, %v1098
        %v1109 = vadd.f32 %v1067, %v1098
        %v1110 = vadd.f32 %v1072, %v1098
        %v1111 = vadd.f32 %v1077, %v1098
        %v1112 = vadd.f32 %v1082, %v1098
        %v1113 = vadd.f32 %v1087, %v1098
        %v1114 = vadd.f32 %v1092, %v1098
        %v1115 = vld [vmem:[%s397] sm:$0xff]
        %v1116 = vlaneseq
        %v1117 = vshrl.u32 %v1116, 7
        %v1118 = vsub.s32 0, %v1117
        %v1119 = vrot.slane %v1115, %v1118
        %1121 = vbcast.lane.b32.xlu0 %v1119, 256
        %v1122 = vpop.permute.xlu0 %1121
        %s1124 = sor.u32 256, 8
        %1125 = vbcast.lane.b32.xlu0 %v1119, %s1124
        %v1126 = vpop.permute.xlu0 %1125
        %v1127 = vlaneseq
        %v1128 = vshrl.u32 %v1127, 7
        %v1129 = vsub.s32 1, %v1128
        %v1130 = vrot.slane %v1115, %v1129
        %1132 = vbcast.lane.b32.xlu0 %v1130, 256
        %v1133 = vpop.permute.xlu0 %1132
        %s1135 = sor.u32 256, 8
        %1136 = vbcast.lane.b32.xlu0 %v1130, %s1135
        %v1137 = vpop.permute.xlu0 %1136
        %v1138 = vlaneseq
        %v1139 = vshrl.u32 %v1138, 7
        %v1140 = vsub.s32 2, %v1139
        %v1141 = vrot.slane %v1115, %v1140
        %1143 = vbcast.lane.b32.xlu0 %v1141, 256
        %v1144 = vpop.permute.xlu0 %1143
        %s1146 = sor.u32 256, 8
        %1147 = vbcast.lane.b32.xlu0 %v1141, %s1146
        %v1148 = vpop.permute.xlu0 %1147
        %v1149 = vlaneseq
        %v1150 = vshrl.u32 %v1149, 7
        %v1151 = vsub.s32 3, %v1150
        %v1152 = vrot.slane %v1115, %v1151
        %1154 = vbcast.lane.b32.xlu0 %v1152, 256
        %v1155 = vpop.permute.xlu0 %1154
        %s1157 = sor.u32 256, 8
        %1158 = vbcast.lane.b32.xlu0 %v1152, %s1157
        %v1159 = vpop.permute.xlu0 %1158
        %v1160 = vlaneseq
        %v1161 = vshrl.u32 %v1160, 7
        %v1162 = vsub.s32 4, %v1161
        %v1163 = vrot.slane %v1115, %v1162
        %1165 = vbcast.lane.b32.xlu0 %v1163, 256
        %v1166 = vpop.permute.xlu0 %1165
        %s1168 = sor.u32 256, 8
        %1169 = vbcast.lane.b32.xlu0 %v1163, %s1168
        %v1170 = vpop.permute.xlu0 %1169
        %v1171 = vlaneseq
        %v1172 = vshrl.u32 %v1171, 7
        %v1173 = vsub.s32 5, %v1172
        %v1174 = vrot.slane %v1115, %v1173
        %1176 = vbcast.lane.b32.xlu0 %v1174, 256
        %v1177 = vpop.permute.xlu0 %1176
        %s1179 = sor.u32 256, 8
        %1180 = vbcast.lane.b32.xlu0 %v1174, %s1179
        %v1181 = vpop.permute.xlu0 %1180
        %v1182 = vlaneseq
        %v1183 = vshrl.u32 %v1182, 7
        %v1184 = vsub.s32 6, %v1183
        %v1185 = vrot.slane %v1115, %v1184
        %1187 = vbcast.lane.b32.xlu0 %v1185, 256
        %v1188 = vpop.permute.xlu0 %1187
        %s1190 = sor.u32 256, 8
        %1191 = vbcast.lane.b32.xlu0 %v1185, %s1190
        %v1192 = vpop.permute.xlu0 %1191
        %v1193 = vlaneseq
        %v1194 = vshrl.u32 %v1193, 7
        %v1195 = vsub.s32 7, %v1194
        %v1196 = vrot.slane %v1115, %v1195
        %1198 = vbcast.lane.b32.xlu0 %v1196, 256
        %v1199 = vpop.permute.xlu0 %1198
        %s1201 = sor.u32 256, 8
        %1202 = vbcast.lane.b32.xlu0 %v1196, %s1201
        %v1203 = vpop.permute.xlu0 %1202
        %v1204 = vld [vmem:[%s401] sm:$0xff]
        %v1206 = vcombine.high %v1204, %v1204
        %v1208 = vunpack.c.l.s4 1966171168
        %v1209 = vunpack.c.0.s8 %v1208
        %v1210 = vlaneseq
        %v1211 = vshrl.u32 %v1210, 7
        %v1212 = vsub.s32 %v1209, %v1211
        %v1213 = vrot.slane %v1204, %v1212
        %v1215 = vunpack.c.l.s4 1966171168
        %v1216 = vunpack.c.0.s8 %v1215
        %v1217 = vlaneseq
        %v1218 = vshrl.u32 %v1217, 7
        %v1219 = vsub.s32 %v1216, %v1218
        %v1220 = vrot.slane %v1206, %v1219
        %v1221 = vcombine.high %v1213, %v1213
        %v1222 = vcombine.high %v1220, %v1220
        %v1224 = vunpack.c.l.s4 1966171168
        %v1225 = vunpack.c.0.s8 %v1224
        %v1226 = vlaneseq
        %v1227 = vshrl.u32 %v1226, 7
        %v1228 = vsub.s32 %v1225, %v1227
        %v1229 = vrot.slane %v1213, %v1228
        %v1231 = vunpack.c.l.s4 1966171168
        %v1232 = vunpack.c.0.s8 %v1231
        %v1233 = vlaneseq
        %v1234 = vshrl.u32 %v1233, 7
        %v1235 = vsub.s32 %v1232, %v1234
        %v1236 = vrot.slane %v1220, %v1235
        %v1238 = vunpack.c.l.s4 1966171168
        %v1239 = vunpack.c.0.s8 %v1238
        %v1240 = vlaneseq
        %v1241 = vshrl.u32 %v1240, 7
        %v1242 = vsub.s32 %v1239, %v1241
        %v1243 = vrot.slane %v1221, %v1242
        %v1245 = vunpack.c.l.s4 1966171168
        %v1246 = vunpack.c.0.s8 %v1245
        %v1247 = vlaneseq
        %v1248 = vshrl.u32 %v1247, 7
        %v1249 = vsub.s32 %v1246, %v1248
        %v1250 = vrot.slane %v1222, %v1249
        %v1251 = vcombine.high %v1229, %v1229
        %v1252 = vcombine.high %v1236, %v1236
        %v1253 = vcombine.high %v1243, %v1243
        %v1254 = vcombine.high %v1250, %v1250
        %v1255 = vlaneseq
        %v1256 = vshrl.u32 %v1255, 7
        %v1257 = vsub.s32 0, %v1256
        %v1258 = vrot.slane %v1229, %v1257
        %v1259 = vlaneseq
        %v1260 = vshrl.u32 %v1259, 7
        %v1261 = vsub.s32 0, %v1260
        %v1262 = vrot.slane %v1243, %v1261
        %v1263 = vlaneseq
        %v1264 = vshrl.u32 %v1263, 7
        %v1265 = vsub.s32 0, %v1264
        %v1266 = vrot.slane %v1251, %v1265
        %v1267 = vlaneseq
        %v1268 = vshrl.u32 %v1267, 7
        %v1269 = vsub.s32 0, %v1268
        %v1270 = vrot.slane %v1253, %v1269
        %v1271 = vlaneseq
        %v1272 = vshrl.u32 %v1271, 7
        %v1273 = vsub.s32 0, %v1272
        %v1274 = vrot.slane %v1236, %v1273
        %v1275 = vlaneseq
        %v1276 = vshrl.u32 %v1275, 7
        %v1277 = vsub.s32 0, %v1276
        %v1278 = vrot.slane %v1250, %v1277
        %v1279 = vlaneseq
        %v1280 = vshrl.u32 %v1279, 7
        %v1281 = vsub.s32 0, %v1280
        %v1282 = vrot.slane %v1252, %v1281
        %v1283 = vlaneseq
        %v1284 = vshrl.u32 %v1283, 7
        %v1285 = vsub.s32 0, %v1284
        %v1286 = vrot.slane %v1254, %v1285
        %v1295 = vmul.f32 %v1122, %v1258
        %v1296 = vmul.f32 %v1126, %v1258
        %v1297 = vmul.f32 %v1133, %v1262
        %v1298 = vmul.f32 %v1137, %v1262
        %v1299 = vmul.f32 %v1144, %v1266
        %v1300 = vmul.f32 %v1148, %v1266
        %v1301 = vmul.f32 %v1155, %v1270
        %v1302 = vmul.f32 %v1159, %v1270
        %v1303 = vmul.f32 %v1166, %v1274
        %v1304 = vmul.f32 %v1170, %v1274
        %v1305 = vmul.f32 %v1177, %v1278
        %v1306 = vmul.f32 %v1181, %v1278
        %v1307 = vmul.f32 %v1188, %v1282
        %v1308 = vmul.f32 %v1192, %v1282
        %v1309 = vmul.f32 %v1199, %v1286
        %v1310 = vmul.f32 %v1203, %v1286
        %1327 = vrot.lane.b32.xlu0 %v1295, 32
        %v1328 = vpop.permute.xlu0 %1327
        %1329 = vrot.lane.b32.xlu0 %v1296, 32
        %v1330 = vpop.permute.xlu0 %1329
        %1331 = vrot.lane.b32.xlu0 %v1297, 32
        %v1332 = vpop.permute.xlu0 %1331
        %1333 = vrot.lane.b32.xlu0 %v1298, 32
        %v1334 = vpop.permute.xlu0 %1333
        %1335 = vrot.lane.b32.xlu0 %v1299, 32
        %v1336 = vpop.permute.xlu0 %1335
        %1337 = vrot.lane.b32.xlu0 %v1300, 32
        %v1338 = vpop.permute.xlu0 %1337
        %1339 = vrot.lane.b32.xlu0 %v1301, 32
        %v1340 = vpop.permute.xlu0 %1339
        %1341 = vrot.lane.b32.xlu0 %v1302, 32
        %v1342 = vpop.permute.xlu0 %1341
        %1343 = vrot.lane.b32.xlu0 %v1303, 32
        %v1344 = vpop.permute.xlu0 %1343
        %1345 = vrot.lane.b32.xlu0 %v1304, 32
        %v1346 = vpop.permute.xlu0 %1345
        %1347 = vrot.lane.b32.xlu0 %v1305, 32
        %v1348 = vpop.permute.xlu0 %1347
        %1349 = vrot.lane.b32.xlu0 %v1306, 32
        %v1350 = vpop.permute.xlu0 %1349
        %1351 = vrot.lane.b32.xlu0 %v1307, 32
        %v1352 = vpop.permute.xlu0 %1351
        %1353 = vrot.lane.b32.xlu0 %v1308, 32
        %v1354 = vpop.permute.xlu0 %1353
        %1355 = vrot.lane.b32.xlu0 %v1309, 32
        %v1356 = vpop.permute.xlu0 %1355
        %1357 = vrot.lane.b32.xlu0 %v1310, 32
        %v1358 = vpop.permute.xlu0 %1357
        %v1375 = vadd.f32 %v1017, %v1328
        %v1376 = vadd.f32 %v1022, %v1330
        %v1377 = vadd.f32 %v1027, %v1332
        %v1378 = vadd.f32 %v1032, %v1334
        %v1379 = vadd.f32 %v1037, %v1336
        %v1380 = vadd.f32 %v1042, %v1338
        %v1381 = vadd.f32 %v1047, %v1340
        %v1382 = vadd.f32 %v1052, %v1342
        %v1383 = vadd.f32 %v1057, %v1344
        %v1384 = vadd.f32 %v1062, %v1346
        %v1385 = vadd.f32 %v1067, %v1348
        %v1386 = vadd.f32 %v1072, %v1350
        %v1387 = vadd.f32 %v1077, %v1352
        %v1388 = vadd.f32 %v1082, %v1354
        %v1389 = vadd.f32 %v1087, %v1356
        %v1390 = vadd.f32 %v1092, %v1358
        %v1391 = vlaneseq
        %v1392 = vshrl.u32 %v1391, 7
        %v1393 = vsub.s32 2, %v1392
        %v1394 = vrot.slane %v402, %v1393
        %1396 = vrot.lane.b32.xlu0 %v1394, 32
        %v1397 = vpop.permute.xlu0 %1396
        %v1399 = vadd.f32 %v1375, %v1397
        %v1400 = vadd.f32 %v1376, %v1397
        %v1401 = vadd.f32 %v1377, %v1397
        %v1402 = vadd.f32 %v1378, %v1397
        %v1403 = vadd.f32 %v1379, %v1397
        %v1404 = vadd.f32 %v1380, %v1397
        %v1405 = vadd.f32 %v1381, %v1397
        %v1406 = vadd.f32 %v1382, %v1397
        %v1407 = vadd.f32 %v1383, %v1397
        %v1408 = vadd.f32 %v1384, %v1397
        %v1409 = vadd.f32 %v1385, %v1397
        %v1410 = vadd.f32 %v1386, %v1397
        %v1411 = vadd.f32 %v1387, %v1397
        %v1412 = vadd.f32 %v1388, %v1397
        %v1413 = vadd.f32 %v1389, %v1397
        %v1414 = vadd.f32 %v1390, %v1397
        %vm1415 = vcmp.ge.f32.partialorder %v1399, 0.0
        %vm1416 = vcmp.ge.f32.partialorder %v1400, 0.0
        %vm1417 = vcmp.ge.f32.partialorder %v1401, 0.0
        %vm1418 = vcmp.ge.f32.partialorder %v1402, 0.0
        %vm1419 = vcmp.ge.f32.partialorder %v1403, 0.0
        %vm1420 = vcmp.ge.f32.partialorder %v1404, 0.0
        %vm1421 = vcmp.ge.f32.partialorder %v1405, 0.0
        %vm1422 = vcmp.ge.f32.partialorder %v1406, 0.0
        %vm1423 = vcmp.ge.f32.partialorder %v1407, 0.0
        %vm1424 = vcmp.ge.f32.partialorder %v1408, 0.0
        %vm1425 = vcmp.ge.f32.partialorder %v1409, 0.0
        %vm1426 = vcmp.ge.f32.partialorder %v1410, 0.0
        %vm1427 = vcmp.ge.f32.partialorder %v1411, 0.0
        %vm1428 = vcmp.ge.f32.partialorder %v1412, 0.0
        %vm1429 = vcmp.ge.f32.partialorder %v1413, 0.0
        %vm1430 = vcmp.ge.f32.partialorder %v1414, 0.0
        %v1431 = vmul.f32 %v1399, 0.2
        %v1432 = vmul.f32 %v1400, 0.2
        %v1433 = vmul.f32 %v1401, 0.2
        %v1434 = vmul.f32 %v1402, 0.2
        %v1435 = vmul.f32 %v1403, 0.2
        %v1436 = vmul.f32 %v1404, 0.2
        %v1437 = vmul.f32 %v1405, 0.2
        %v1438 = vmul.f32 %v1406, 0.2
        %v1439 = vmul.f32 %v1407, 0.2
        %v1440 = vmul.f32 %v1408, 0.2
        %v1441 = vmul.f32 %v1409, 0.2
        %v1442 = vmul.f32 %v1410, 0.2
        %v1443 = vmul.f32 %v1411, 0.2
        %v1444 = vmul.f32 %v1412, 0.2
        %v1445 = vmul.f32 %v1413, 0.2
        %v1446 = vmul.f32 %v1414, 0.2
        %v1447 = vsel %vm1415, %v1399, %v1431
        %v1448 = vsel %vm1416, %v1400, %v1432
        %v1449 = vsel %vm1417, %v1401, %v1433
        %v1450 = vsel %vm1418, %v1402, %v1434
        %v1451 = vsel %vm1419, %v1403, %v1435
        %v1452 = vsel %vm1420, %v1404, %v1436
        %v1453 = vsel %vm1421, %v1405, %v1437
        %v1454 = vsel %vm1422, %v1406, %v1438
        %v1455 = vsel %vm1423, %v1407, %v1439
        %v1456 = vsel %vm1424, %v1408, %v1440
        %v1457 = vsel %vm1425, %v1409, %v1441
        %v1458 = vsel %vm1426, %v1410, %v1442
        %v1459 = vsel %vm1427, %v1411, %v1443
        %v1460 = vsel %vm1428, %v1412, %v1444
        %v1461 = vsel %vm1429, %v1413, %v1445
        %v1462 = vsel %vm1430, %v1414, %v1446
        %v1463 = vlaneseq
        %v1464 = vshrl.u32 %v1463, 7
        %v1465 = vsub.s32 4, %v1464
        %v1466 = vrot.slane %v402, %v1465
        %1468 = vrot.lane.b32.xlu0 %v1466, 32
        %v1469 = vpop.permute.xlu0 %1468
        %v1471 = vmul.f32 %v1447, %v1469
        %v1472 = vmul.f32 %v1448, %v1469
        %v1473 = vmul.f32 %v1449, %v1469
        %v1474 = vmul.f32 %v1450, %v1469
        %v1475 = vmul.f32 %v1451, %v1469
        %v1476 = vmul.f32 %v1452, %v1469
        %v1477 = vmul.f32 %v1453, %v1469
        %v1478 = vmul.f32 %v1454, %v1469
        %v1479 = vmul.f32 %v1455, %v1469
        %v1480 = vmul.f32 %v1456, %v1469
        %v1481 = vmul.f32 %v1457, %v1469
        %v1482 = vmul.f32 %v1458, %v1469
        %v1483 = vmul.f32 %v1459, %v1469
        %v1484 = vmul.f32 %v1460, %v1469
        %v1485 = vmul.f32 %v1461, %v1469
        %v1486 = vmul.f32 %v1462, %v1469
        %1503 = vrot.lane.b32.xlu0 %v1471, 96
        %v1504 = vpop.permute.xlu0 %1503
        %1505 = vrot.lane.b32.xlu0 %v1472, 96
        %v1506 = vpop.permute.xlu0 %1505
        %1507 = vrot.lane.b32.xlu0 %v1473, 96
        %v1508 = vpop.permute.xlu0 %1507
        %1509 = vrot.lane.b32.xlu0 %v1474, 96
        %v1510 = vpop.permute.xlu0 %1509
        %1511 = vrot.lane.b32.xlu0 %v1475, 96
        %v1512 = vpop.permute.xlu0 %1511
        %1513 = vrot.lane.b32.xlu0 %v1476, 96
        %v1514 = vpop.permute.xlu0 %1513
        %1515 = vrot.lane.b32.xlu0 %v1477, 96
        %v1516 = vpop.permute.xlu0 %1515
        %1517 = vrot.lane.b32.xlu0 %v1478, 96
        %v1518 = vpop.permute.xlu0 %1517
        %1519 = vrot.lane.b32.xlu0 %v1479, 96
        %v1520 = vpop.permute.xlu0 %1519
        %1521 = vrot.lane.b32.xlu0 %v1480, 96
        %v1522 = vpop.permute.xlu0 %1521
        %1523 = vrot.lane.b32.xlu0 %v1481, 96
        %v1524 = vpop.permute.xlu0 %1523
        %1525 = vrot.lane.b32.xlu0 %v1482, 96
        %v1526 = vpop.permute.xlu0 %1525
        %1527 = vrot.lane.b32.xlu0 %v1483, 96
        %v1528 = vpop.permute.xlu0 %1527
        %1529 = vrot.lane.b32.xlu0 %v1484, 96
        %v1530 = vpop.permute.xlu0 %1529
        %1531 = vrot.lane.b32.xlu0 %v1485, 96
        %v1532 = vpop.permute.xlu0 %1531
        %1533 = vrot.lane.b32.xlu0 %v1486, 96
        %v1534 = vpop.permute.xlu0 %1533
        %v1551 = vsel %vm443, %v1504, 0.0
        %1552 = vadd.xlane.f32.xlu0 %v1551
        %v1553 = vpop.xlane.xlu0 %1552
        %v1554 = vsel %vm443, %v1506, 0.0
        %1555 = vadd.xlane.f32.xlu0 %v1554
        %v1556 = vpop.xlane.xlu0 %1555
        %v1557 = vsel %vm443, %v1508, 0.0
        %1558 = vadd.xlane.f32.xlu0 %v1557
        %v1559 = vpop.xlane.xlu0 %1558
        %v1560 = vsel %vm443, %v1510, 0.0
        %1561 = vadd.xlane.f32.xlu0 %v1560
        %v1562 = vpop.xlane.xlu0 %1561
        %v1563 = vsel %vm443, %v1512, 0.0
        %1564 = vadd.xlane.f32.xlu0 %v1563
        %v1565 = vpop.xlane.xlu0 %1564
        %v1566 = vsel %vm443, %v1514, 0.0
        %1567 = vadd.xlane.f32.xlu0 %v1566
        %v1568 = vpop.xlane.xlu0 %1567
        %v1569 = vsel %vm443, %v1516, 0.0
        %1570 = vadd.xlane.f32.xlu0 %v1569
        %v1571 = vpop.xlane.xlu0 %1570
        %v1572 = vsel %vm443, %v1518, 0.0
        %1573 = vadd.xlane.f32.xlu0 %v1572
        %v1574 = vpop.xlane.xlu0 %1573
        %v1575 = vsel %vm443, %v1520, 0.0
        %1576 = vadd.xlane.f32.xlu0 %v1575
        %v1577 = vpop.xlane.xlu0 %1576
        %v1578 = vsel %vm443, %v1522, 0.0
        %1579 = vadd.xlane.f32.xlu0 %v1578
        %v1580 = vpop.xlane.xlu0 %1579
        %v1581 = vsel %vm443, %v1524, 0.0
        %1582 = vadd.xlane.f32.xlu0 %v1581
        %v1583 = vpop.xlane.xlu0 %1582
        %v1584 = vsel %vm443, %v1526, 0.0
        %1585 = vadd.xlane.f32.xlu0 %v1584
        %v1586 = vpop.xlane.xlu0 %1585
        %v1587 = vsel %vm443, %v1528, 0.0
        %1588 = vadd.xlane.f32.xlu0 %v1587
        %v1589 = vpop.xlane.xlu0 %1588
        %v1590 = vsel %vm443, %v1530, 0.0
        %1591 = vadd.xlane.f32.xlu0 %v1590
        %v1592 = vpop.xlane.xlu0 %1591
        %v1593 = vsel %vm443, %v1532, 0.0
        %1594 = vadd.xlane.f32.xlu0 %v1593
        %v1595 = vpop.xlane.xlu0 %1594
        %v1596 = vsel %vm443, %v1534, 0.0
        %1597 = vadd.xlane.f32.xlu0 %v1596
        %v1598 = vpop.xlane.xlu0 %1597
        %v1599 = vlaneseq
        %v1600 = vshrl.u32 %v1599, 7
        %v1601 = vsub.s32 5, %v1600
        %v1602 = vrot.slane %v402, %v1601
        %v1603 = vadd.f32 %v1553, %v1602
        %v1604 = vadd.f32 %v1556, %v1602
        %v1605 = vadd.f32 %v1559, %v1602
        %v1606 = vadd.f32 %v1562, %v1602
        %v1607 = vadd.f32 %v1565, %v1602
        %v1608 = vadd.f32 %v1568, %v1602
        %v1609 = vadd.f32 %v1571, %v1602
        %v1610 = vadd.f32 %v1574, %v1602
        %v1611 = vadd.f32 %v1577, %v1602
        %v1612 = vadd.f32 %v1580, %v1602
        %v1613 = vadd.f32 %v1583, %v1602
        %v1614 = vadd.f32 %v1586, %v1602
        %v1615 = vadd.f32 %v1589, %v1602
        %v1616 = vadd.f32 %v1592, %v1602
        %v1617 = vadd.f32 %v1595, %v1602
        %v1618 = vadd.f32 %v1598, %v1602
        %vm1619 = vcmp.gt.f32.partialorder %v1122, 0.0
        %vm1620 = vcmp.gt.f32.partialorder %v1126, 0.0
        %vm1621 = vcmp.gt.f32.partialorder %v1133, 0.0
        %vm1622 = vcmp.gt.f32.partialorder %v1137, 0.0
        %vm1623 = vcmp.gt.f32.partialorder %v1144, 0.0
        %vm1624 = vcmp.gt.f32.partialorder %v1148, 0.0
        %vm1625 = vcmp.gt.f32.partialorder %v1155, 0.0
        %vm1626 = vcmp.gt.f32.partialorder %v1159, 0.0
        %vm1627 = vcmp.gt.f32.partialorder %v1166, 0.0
        %vm1628 = vcmp.gt.f32.partialorder %v1170, 0.0
        %vm1629 = vcmp.gt.f32.partialorder %v1177, 0.0
        %vm1630 = vcmp.gt.f32.partialorder %v1181, 0.0
        %vm1631 = vcmp.gt.f32.partialorder %v1188, 0.0
        %vm1632 = vcmp.gt.f32.partialorder %v1192, 0.0
        %vm1633 = vcmp.gt.f32.partialorder %v1199, 0.0
        %vm1634 = vcmp.gt.f32.partialorder %v1203, 0.0
        %v1635 = vsel %vm1619, %v1603, -1e+30
        %v1636 = vsel %vm1620, %v1604, -1e+30
        %v1637 = vsel %vm1621, %v1605, -1e+30
        %v1638 = vsel %vm1622, %v1606, -1e+30
        %v1639 = vsel %vm1623, %v1607, -1e+30
        %v1640 = vsel %vm1624, %v1608, -1e+30
        %v1641 = vsel %vm1625, %v1609, -1e+30
        %v1642 = vsel %vm1626, %v1610, -1e+30
        %v1643 = vsel %vm1627, %v1611, -1e+30
        %v1644 = vsel %vm1628, %v1612, -1e+30
        %v1645 = vsel %vm1629, %v1613, -1e+30
        %v1646 = vsel %vm1630, %v1614, -1e+30
        %v1647 = vsel %vm1631, %v1615, -1e+30
        %v1648 = vsel %vm1632, %v1616, -1e+30
        %v1649 = vsel %vm1633, %v1617, -1e+30
        %v1650 = vsel %vm1634, %v1618, -1e+30
        %vm1651 = vcmask 7168
        %v1652 = vsel %vm1651, %v1635, -inf
        %v1653 = vsel %vm1651, %v1636, -inf
        %v1654 = vmax.f32 %v1652, %v1653
        %v1655 = vrot.slane %v1654, 4
        %v1656 = vmax.f32 %v1654, %v1655
        %v1657 = vrot.slane %v1656, 2
        %v1658 = vmax.f32 %v1656, %v1657
        %v1659 = vrot.slane %v1658, 1
        %v1660 = vmax.f32 %v1658, %v1659
        %v1661 = vsel %vm1651, %v1637, -inf
        %v1662 = vsel %vm1651, %v1638, -inf
        %v1663 = vmax.f32 %v1661, %v1662
        %v1664 = vrot.slane %v1663, 4
        %v1665 = vmax.f32 %v1663, %v1664
        %v1666 = vrot.slane %v1665, 2
        %v1667 = vmax.f32 %v1665, %v1666
        %v1668 = vrot.slane %v1667, 1
        %v1669 = vmax.f32 %v1667, %v1668
        %v1670 = vsel %vm1651, %v1639, -inf
        %v1671 = vsel %vm1651, %v1640, -inf
        %v1672 = vmax.f32 %v1670, %v1671
        %v1673 = vrot.slane %v1672, 4
        %v1674 = vmax.f32 %v1672, %v1673
        %v1675 = vrot.slane %v1674, 2
        %v1676 = vmax.f32 %v1674, %v1675
        %v1677 = vrot.slane %v1676, 1
        %v1678 = vmax.f32 %v1676, %v1677
        %v1679 = vsel %vm1651, %v1641, -inf
        %v1680 = vsel %vm1651, %v1642, -inf
        %v1681 = vmax.f32 %v1679, %v1680
        %v1682 = vrot.slane %v1681, 4
        %v1683 = vmax.f32 %v1681, %v1682
        %v1684 = vrot.slane %v1683, 2
        %v1685 = vmax.f32 %v1683, %v1684
        %v1686 = vrot.slane %v1685, 1
        %v1687 = vmax.f32 %v1685, %v1686
        %v1688 = vsel %vm1651, %v1643, -inf
        %v1689 = vsel %vm1651, %v1644, -inf
        %v1690 = vmax.f32 %v1688, %v1689
        %v1691 = vrot.slane %v1690, 4
        %v1692 = vmax.f32 %v1690, %v1691
        %v1693 = vrot.slane %v1692, 2
        %v1694 = vmax.f32 %v1692, %v1693
        %v1695 = vrot.slane %v1694, 1
        %v1696 = vmax.f32 %v1694, %v1695
        %v1697 = vsel %vm1651, %v1645, -inf
        %v1698 = vsel %vm1651, %v1646, -inf
        %v1699 = vmax.f32 %v1697, %v1698
        %v1700 = vrot.slane %v1699, 4
        %v1701 = vmax.f32 %v1699, %v1700
        %v1702 = vrot.slane %v1701, 2
        %v1703 = vmax.f32 %v1701, %v1702
        %v1704 = vrot.slane %v1703, 1
        %v1705 = vmax.f32 %v1703, %v1704
        %v1706 = vsel %vm1651, %v1647, -inf
        %v1707 = vsel %vm1651, %v1648, -inf
        %v1708 = vmax.f32 %v1706, %v1707
        %v1709 = vrot.slane %v1708, 4
        %v1710 = vmax.f32 %v1708, %v1709
        %v1711 = vrot.slane %v1710, 2
        %v1712 = vmax.f32 %v1710, %v1711
        %v1713 = vrot.slane %v1712, 1
        %v1714 = vmax.f32 %v1712, %v1713
        %v1715 = vsel %vm1651, %v1649, -inf
        %v1716 = vsel %vm1651, %v1650, -inf
        %v1717 = vmax.f32 %v1715, %v1716
        %v1718 = vrot.slane %v1717, 4
        %v1719 = vmax.f32 %v1717, %v1718
        %v1720 = vrot.slane %v1719, 2
        %v1721 = vmax.f32 %v1719, %v1720
        %v1722 = vrot.slane %v1721, 1
        %v1723 = vmax.f32 %v1721, %v1722
        %v1724 = vmax.f32 %v1660, 0.0
        %v1725 = vmax.f32 %v1669, 0.0
        %v1726 = vmax.f32 %v1678, 0.0
        %v1727 = vmax.f32 %v1687, 0.0
        %v1728 = vmax.f32 %v1696, 0.0
        %v1729 = vmax.f32 %v1705, 0.0
        %v1730 = vmax.f32 %v1714, 0.0
        %v1731 = vmax.f32 %v1723, 0.0
        %v1732 = vsub.f32 %v1603, %v1724
        %v1733 = vsub.f32 %v1604, %v1724
        %v1734 = vsub.f32 %v1605, %v1725
        %v1735 = vsub.f32 %v1606, %v1725
        %v1736 = vsub.f32 %v1607, %v1726
        %v1737 = vsub.f32 %v1608, %v1726
        %v1738 = vsub.f32 %v1609, %v1727
        %v1739 = vsub.f32 %v1610, %v1727
        %v1740 = vsub.f32 %v1611, %v1728
        %v1741 = vsub.f32 %v1612, %v1728
        %v1742 = vsub.f32 %v1613, %v1729
        %v1743 = vsub.f32 %v1614, %v1729
        %v1744 = vsub.f32 %v1615, %v1730
        %v1745 = vsub.f32 %v1616, %v1730
        %v1746 = vsub.f32 %v1617, %v1731
        %v1747 = vsub.f32 %v1618, %v1731
        %v1748 = vmul.f32 %v1732, 1.442695
        %v1749 = vpow.pop %v1748
        %v1750 = vmul.f32 %v1733, 1.442695
        %v1751 = vpow.pop %v1750
        %v1752 = vmul.f32 %v1734, 1.442695
        %v1753 = vpow.pop %v1752
        %v1754 = vmul.f32 %v1735, 1.442695
        %v1755 = vpow.pop %v1754
        %v1756 = vmul.f32 %v1736, 1.442695
        %v1757 = vpow.pop %v1756
        %v1758 = vmul.f32 %v1737, 1.442695
        %v1759 = vpow.pop %v1758
        %v1760 = vmul.f32 %v1738, 1.442695
        %v1761 = vpow.pop %v1760
        %v1762 = vmul.f32 %v1739, 1.442695
        %v1763 = vpow.pop %v1762
        %v1764 = vmul.f32 %v1740, 1.442695
        %v1765 = vpow.pop %v1764
        %v1766 = vmul.f32 %v1741, 1.442695
        %v1767 = vpow.pop %v1766
        %v1768 = vmul.f32 %v1742, 1.442695
        %v1769 = vpow.pop %v1768
        %v1770 = vmul.f32 %v1743, 1.442695
        %v1771 = vpow.pop %v1770
        %v1772 = vmul.f32 %v1744, 1.442695
        %v1773 = vpow.pop %v1772
        %v1774 = vmul.f32 %v1745, 1.442695
        %v1775 = vpow.pop %v1774
        %v1776 = vmul.f32 %v1746, 1.442695
        %v1777 = vpow.pop %v1776
        %v1778 = vmul.f32 %v1747, 1.442695
        %v1779 = vpow.pop %v1778
        %v1780 = vmul.f32 %v1749, %v1122
        %v1781 = vmul.f32 %v1751, %v1126
        %v1782 = vmul.f32 %v1753, %v1133
        %v1783 = vmul.f32 %v1755, %v1137
        %v1784 = vmul.f32 %v1757, %v1144
        %v1785 = vmul.f32 %v1759, %v1148
        %v1786 = vmul.f32 %v1761, %v1155
        %v1787 = vmul.f32 %v1763, %v1159
        %v1788 = vmul.f32 %v1765, %v1166
        %v1789 = vmul.f32 %v1767, %v1170
        %v1790 = vmul.f32 %v1769, %v1177
        %v1791 = vmul.f32 %v1771, %v1181
        %v1792 = vmul.f32 %v1773, %v1188
        %v1793 = vmul.f32 %v1775, %v1192
        %v1794 = vmul.f32 %v1777, %v1199
        %v1795 = vmul.f32 %v1779, %v1203
        %v1796 = vsel %vm1651, %v1780, 0.0
        %v1797 = vsel %vm1651, %v1781, 0.0
        %v1798 = vadd.f32 %v1796, %v1797
        %v1799 = vrot.slane %v1798, 4
        %v1800 = vadd.f32 %v1798, %v1799
        %v1801 = vrot.slane %v1800, 2
        %v1802 = vadd.f32 %v1800, %v1801
        %v1803 = vrot.slane %v1802, 1
        %v1804 = vadd.f32 %v1802, %v1803
        %v1805 = vsel %vm1651, %v1782, 0.0
        %v1806 = vsel %vm1651, %v1783, 0.0
        %v1807 = vadd.f32 %v1805, %v1806
        %v1808 = vrot.slane %v1807, 4
        %v1809 = vadd.f32 %v1807, %v1808
        %v1810 = vrot.slane %v1809, 2
        %v1811 = vadd.f32 %v1809, %v1810
        %v1812 = vrot.slane %v1811, 1
        %v1813 = vadd.f32 %v1811, %v1812
        %v1814 = vsel %vm1651, %v1784, 0.0
        %v1815 = vsel %vm1651, %v1785, 0.0
        %v1816 = vadd.f32 %v1814, %v1815
        %v1817 = vrot.slane %v1816, 4
        %v1818 = vadd.f32 %v1816, %v1817
        %v1819 = vrot.slane %v1818, 2
        %v1820 = vadd.f32 %v1818, %v1819
        %v1821 = vrot.slane %v1820, 1
        %v1822 = vadd.f32 %v1820, %v1821
        %v1823 = vsel %vm1651, %v1786, 0.0
        %v1824 = vsel %vm1651, %v1787, 0.0
        %v1825 = vadd.f32 %v1823, %v1824
        %v1826 = vrot.slane %v1825, 4
        %v1827 = vadd.f32 %v1825, %v1826
        %v1828 = vrot.slane %v1827, 2
        %v1829 = vadd.f32 %v1827, %v1828
        %v1830 = vrot.slane %v1829, 1
        %v1831 = vadd.f32 %v1829, %v1830
        %v1832 = vsel %vm1651, %v1788, 0.0
        %v1833 = vsel %vm1651, %v1789, 0.0
        %v1834 = vadd.f32 %v1832, %v1833
        %v1835 = vrot.slane %v1834, 4
        %v1836 = vadd.f32 %v1834, %v1835
        %v1837 = vrot.slane %v1836, 2
        %v1838 = vadd.f32 %v1836, %v1837
        %v1839 = vrot.slane %v1838, 1
        %v1840 = vadd.f32 %v1838, %v1839
        %v1841 = vsel %vm1651, %v1790, 0.0
        %v1842 = vsel %vm1651, %v1791, 0.0
        %v1843 = vadd.f32 %v1841, %v1842
        %v1844 = vrot.slane %v1843, 4
        %v1845 = vadd.f32 %v1843, %v1844
        %v1846 = vrot.slane %v1845, 2
        %v1847 = vadd.f32 %v1845, %v1846
        %v1848 = vrot.slane %v1847, 1
        %v1849 = vadd.f32 %v1847, %v1848
        %v1850 = vsel %vm1651, %v1792, 0.0
        %v1851 = vsel %vm1651, %v1793, 0.0
        %v1852 = vadd.f32 %v1850, %v1851
        %v1853 = vrot.slane %v1852, 4
        %v1854 = vadd.f32 %v1852, %v1853
        %v1855 = vrot.slane %v1854, 2
        %v1856 = vadd.f32 %v1854, %v1855
        %v1857 = vrot.slane %v1856, 1
        %v1858 = vadd.f32 %v1856, %v1857
        %v1859 = vsel %vm1651, %v1794, 0.0
        %v1860 = vsel %vm1651, %v1795, 0.0
        %v1861 = vadd.f32 %v1859, %v1860
        %v1862 = vrot.slane %v1861, 4
        %v1863 = vadd.f32 %v1861, %v1862
        %v1864 = vrot.slane %v1863, 2
        %v1865 = vadd.f32 %v1863, %v1864
        %v1866 = vrot.slane %v1865, 1
        %v1867 = vadd.f32 %v1865, %v1866
        %v1868 = vadd.f32 %v1804, 1e-10
        %v1869 = vadd.f32 %v1813, 1e-10
        %v1870 = vadd.f32 %v1822, 1e-10
        %v1871 = vadd.f32 %v1831, 1e-10
        %v1872 = vadd.f32 %v1840, 1e-10
        %v1873 = vadd.f32 %v1849, 1e-10
        %v1874 = vadd.f32 %v1858, 1e-10
        %v1875 = vadd.f32 %v1867, 1e-10
        %v1876 = vrcp.pop %v1868
        %v1877 = vrcp.pop %v1869
        %v1878 = vrcp.pop %v1870
        %v1879 = vrcp.pop %v1871
        %v1880 = vrcp.pop %v1872
        %v1881 = vrcp.pop %v1873
        %v1882 = vrcp.pop %v1874
        %v1883 = vrcp.pop %v1875
        %v1884 = vmul.f32 %v1780, %v1876
        %v1885 = vmul.f32 %v1781, %v1876
        %v1886 = vmul.f32 %v1782, %v1877
        %v1887 = vmul.f32 %v1783, %v1877
        %v1888 = vmul.f32 %v1784, %v1878
        %v1889 = vmul.f32 %v1785, %v1878
        %v1890 = vmul.f32 %v1786, %v1879
        %v1891 = vmul.f32 %v1787, %v1879
        %v1892 = vmul.f32 %v1788, %v1880
        %v1893 = vmul.f32 %v1789, %v1880
        %v1894 = vmul.f32 %v1790, %v1881
        %v1895 = vmul.f32 %v1791, %v1881
        %v1896 = vmul.f32 %v1792, %v1882
        %v1897 = vmul.f32 %v1793, %v1882
        %v1898 = vmul.f32 %v1794, %v1883
        %v1899 = vmul.f32 %v1795, %v1883
        %1901 = vset.pattern.permute.xlu0 0
        %1902 = vperm.xlu0 %1901, %v1884
        %v1903 = vpop.permute.xlu0 %1902
        %1906 = vset.pattern.permute.xlu0 0
        %1907 = vperm.xlu0 %1906, %v1885
        %v1908 = vpop.permute.xlu0 %1907
        %1911 = vset.pattern.permute.xlu0 0
        %1912 = vperm.xlu0 %1911, %v1886
        %v1913 = vpop.permute.xlu0 %1912
        %1916 = vset.pattern.permute.xlu0 0
        %1917 = vperm.xlu0 %1916, %v1887
        %v1918 = vpop.permute.xlu0 %1917
        %1921 = vset.pattern.permute.xlu0 0
        %1922 = vperm.xlu0 %1921, %v1888
        %v1923 = vpop.permute.xlu0 %1922
        %1926 = vset.pattern.permute.xlu0 0
        %1927 = vperm.xlu0 %1926, %v1889
        %v1928 = vpop.permute.xlu0 %1927
        %1931 = vset.pattern.permute.xlu0 0
        %1932 = vperm.xlu0 %1931, %v1890
        %v1933 = vpop.permute.xlu0 %1932
        %1936 = vset.pattern.permute.xlu0 0
        %1937 = vperm.xlu0 %1936, %v1891
        %v1938 = vpop.permute.xlu0 %1937
        %1941 = vset.pattern.permute.xlu0 0
        %1942 = vperm.xlu0 %1941, %v1892
        %v1943 = vpop.permute.xlu0 %1942
        %1946 = vset.pattern.permute.xlu0 0
        %1947 = vperm.xlu0 %1946, %v1893
        %v1948 = vpop.permute.xlu0 %1947
        %1951 = vset.pattern.permute.xlu0 0
        %1952 = vperm.xlu0 %1951, %v1894
        %v1953 = vpop.permute.xlu0 %1952
        %1956 = vset.pattern.permute.xlu0 0
        %1957 = vperm.xlu0 %1956, %v1895
        %v1958 = vpop.permute.xlu0 %1957
        %1961 = vset.pattern.permute.xlu0 0
        %1962 = vperm.xlu0 %1961, %v1896
        %v1963 = vpop.permute.xlu0 %1962
        %1966 = vset.pattern.permute.xlu0 0
        %1967 = vperm.xlu0 %1966, %v1897
        %v1968 = vpop.permute.xlu0 %1967
        %1971 = vset.pattern.permute.xlu0 0
        %1972 = vperm.xlu0 %1971, %v1898
        %v1973 = vpop.permute.xlu0 %1972
        %1976 = vset.pattern.permute.xlu0 0
        %1977 = vperm.xlu0 %1976, %v1899
        %v1978 = vpop.permute.xlu0 %1977
        %v1980 = vmul.f32 %v1903, %v1099
        %v1981 = vmul.f32 %v1908, %v1100
        %v1982 = vmul.f32 %v1913, %v1101
        %v1983 = vmul.f32 %v1918, %v1102
        %v1984 = vmul.f32 %v1923, %v1103
        %v1985 = vmul.f32 %v1928, %v1104
        %v1986 = vmul.f32 %v1933, %v1105
        %v1987 = vmul.f32 %v1938, %v1106
        %v1988 = vmul.f32 %v1943, %v1107
        %v1989 = vmul.f32 %v1948, %v1108
        %v1990 = vmul.f32 %v1953, %v1109
        %v1991 = vmul.f32 %v1958, %v1110
        %v1992 = vmul.f32 %v1963, %v1111
        %v1993 = vmul.f32 %v1968, %v1112
        %v1994 = vmul.f32 %v1973, %v1113
        %v1995 = vmul.f32 %v1978, %v1114
        %v1996 = vsel %vm443, %v1980, 0.0
        %v1997 = vsel %vm443, %v1981, 0.0
        %v1998 = vadd.f32 %v1996, %v1997
        %v1999 = vrot.slane %v1998, 4
        %v2000 = vadd.f32 %v1998, %v1999
        %v2001 = vrot.slane %v2000, 2
        %v2002 = vadd.f32 %v2000, %v2001
        %v2003 = vrot.slane %v2002, 1
        %v2004 = vadd.f32 %v2002, %v2003
        %v2005 = vsel %vm443, %v1982, 0.0
        %v2006 = vsel %vm443, %v1983, 0.0
        %v2007 = vadd.f32 %v2005, %v2006
        %v2008 = vrot.slane %v2007, 4
        %v2009 = vadd.f32 %v2007, %v2008
        %v2010 = vrot.slane %v2009, 2
        %v2011 = vadd.f32 %v2009, %v2010
        %v2012 = vrot.slane %v2011, 1
        %v2013 = vadd.f32 %v2011, %v2012
        %v2014 = vsel %vm443, %v1984, 0.0
        %v2015 = vsel %vm443, %v1985, 0.0
        %v2016 = vadd.f32 %v2014, %v2015
        %v2017 = vrot.slane %v2016, 4
        %v2018 = vadd.f32 %v2016, %v2017
        %v2019 = vrot.slane %v2018, 2
        %v2020 = vadd.f32 %v2018, %v2019
        %v2021 = vrot.slane %v2020, 1
        %v2022 = vadd.f32 %v2020, %v2021
        %v2023 = vsel %vm443, %v1986, 0.0
        %v2024 = vsel %vm443, %v1987, 0.0
        %v2025 = vadd.f32 %v2023, %v2024
        %v2026 = vrot.slane %v2025, 4
        %v2027 = vadd.f32 %v2025, %v2026
        %v2028 = vrot.slane %v2027, 2
        %v2029 = vadd.f32 %v2027, %v2028
        %v2030 = vrot.slane %v2029, 1
        %v2031 = vadd.f32 %v2029, %v2030
        %v2032 = vsel %vm443, %v1988, 0.0
        %v2033 = vsel %vm443, %v1989, 0.0
        %v2034 = vadd.f32 %v2032, %v2033
        %v2035 = vrot.slane %v2034, 4
        %v2036 = vadd.f32 %v2034, %v2035
        %v2037 = vrot.slane %v2036, 2
        %v2038 = vadd.f32 %v2036, %v2037
        %v2039 = vrot.slane %v2038, 1
        %v2040 = vadd.f32 %v2038, %v2039
        %v2041 = vsel %vm443, %v1990, 0.0
        %v2042 = vsel %vm443, %v1991, 0.0
        %v2043 = vadd.f32 %v2041, %v2042
        %v2044 = vrot.slane %v2043, 4
        %v2045 = vadd.f32 %v2043, %v2044
        %v2046 = vrot.slane %v2045, 2
        %v2047 = vadd.f32 %v2045, %v2046
        %v2048 = vrot.slane %v2047, 1
        %v2049 = vadd.f32 %v2047, %v2048
        %v2050 = vsel %vm443, %v1992, 0.0
        %v2051 = vsel %vm443, %v1993, 0.0
        %v2052 = vadd.f32 %v2050, %v2051
        %v2053 = vrot.slane %v2052, 4
        %v2054 = vadd.f32 %v2052, %v2053
        %v2055 = vrot.slane %v2054, 2
        %v2056 = vadd.f32 %v2054, %v2055
        %v2057 = vrot.slane %v2056, 1
        %v2058 = vadd.f32 %v2056, %v2057
        %v2059 = vsel %vm443, %v1994, 0.0
        %v2060 = vsel %vm443, %v1995, 0.0
        %v2061 = vadd.f32 %v2059, %v2060
        %v2062 = vrot.slane %v2061, 4
        %v2063 = vadd.f32 %v2061, %v2062
        %v2064 = vrot.slane %v2063, 2
        %v2065 = vadd.f32 %v2063, %v2064
        %v2066 = vrot.slane %v2065, 1
        %v2067 = vadd.f32 %v2065, %v2066
        %v2068 = vld [vmem:[%s6] sm:$0xff]
        %v2069 = vld [vmem:[%s6 + $0x8] sm:$0xff]
        %v2070 = vld [vmem:[%s6 + $0x10] sm:$0xff]
        %v2071 = vld [vmem:[%s6 + $0x18] sm:$0xff]
        %v2072 = vlaneseq
        %v2073 = vshrl.u32 %v2072, 7
        %v2074 = vsub.s32 3, %v2073
        %v2075 = vrot.slane %v402, %v2074
        %vm2084 = vcmask 1041409
        %v2085 = vsel %vm2084, %v2013, %v2004
        %vm2086 = vcmask 1042434
        %v2087 = vsel %vm2086, %v2022, %v2085
        %vm2088 = vcmask 1043459
        %v2089 = vsel %vm2088, %v2031, %v2087
        %vm2090 = vcmask 1044484
        %v2091 = vsel %vm2090, %v2040, %v2089
        %vm2092 = vcmask 1045509
        %v2093 = vsel %vm2092, %v2049, %v2091
        %vm2094 = vcmask 1046534
        %v2095 = vsel %vm2094, %v2058, %v2093
        %vm2096 = vcmask 1047559
        %v2097 = vsel %vm2096, %v2067, %v2095
        %v2098 = vsel %vm443, %v2097, 0
        %2100 = vmatprep.subr.mxu0 0.0
        %2101 = vmatpush1.msra.mxu0 %v2068
        %2102 = vmatprep.subr.mxu0 0.0
        %2103 = vmatpush1.msra.mxu0 %v2069
        %2104 = vmatprep.subr.mxu0 0.0
        %2105 = vmatpush1.msra.mxu0 %v2070
        %2106 = vmatprep.subr.mxu0 0.0
        %2107 = vmatpush1.msra.mxu0 %v2071
        %2108 = vmatprep.subr.mxu0 0.0
        %2109 = vmatpush1.msra.mxu0 0.0
        %2110 = vmatprep.subr.mxu0 0.0
        %2111 = vmatpush1.msra.mxu0 0.0
        %2112 = vmatprep.subr.mxu0 0.0
        %2113 = vmatpush1.msra.mxu0 0.0
        %2114 = vmatprep.subr.mxu0 0.0
        %2115 = vmatpush1.msra.mxu0 0.0
        %2116 = vmatprep.subr.mxu0 0.0
        %2117 = vmatpush1.msra.mxu0 0.0
        %2118 = vmatprep.subr.mxu0 0.0
        %2119 = vmatpush1.msra.mxu0 0.0
        %2120 = vmatprep.subr.mxu0 0.0
        %2121 = vmatpush1.msra.mxu0 0.0
        %2122 = vmatprep.subr.mxu0 0.0
        %2123 = vmatpush1.msra.mxu0 0.0
        %2124 = vmatprep.subr.mxu0 0.0
        %2125 = vmatpush1.msra.mxu0 0.0
        %2126 = vmatprep.subr.mxu0 0.0
        %2127 = vmatpush1.msra.mxu0 0.0
        %2128 = vmatprep.subr.mxu0 0.0
        %2129 = vmatpush1.msra.mxu0 0.0
        %2130 = vmatprep.subr.mxu0 0.0
        %2131 = vmatpush1.msra.mxu0 0.0
        %2132 = vmatprep.subr.mxu0 0.0
        %2133 = vmatpush1.msra.mxu0 0.0
        %2134 = vmatprep.subr.mxu0 0.0
        %2135 = vmatpush1.msra.mxu0 0.0
        %2136 = vmatprep.subr.mxu0 0.0
        %2137 = vmatpush1.msra.mxu0 0.0
        %2138 = vmatprep.subr.mxu0 0.0
        %2139 = vmatpush1.msra.mxu0 0.0
        %2140 = vmatprep.subr.mxu0 0.0
        %2141 = vmatpush1.msra.mxu0 0.0
        %2142 = vmatprep.subr.mxu0 0.0
        %2143 = vmatpush1.msra.mxu0 0.0
        %2144 = vmatprep.subr.mxu0 0.0
        %2145 = vmatpush1.msra.mxu0 0.0
        %2146 = vmatprep.subr.mxu0 0.0
        %2147 = vmatpush1.msra.mxu0 0.0
        %2148 = vmatprep.subr.mxu0 0.0
        %2149 = vmatpush1.msra.mxu0 0.0
        %2150 = vmatprep.subr.mxu0 0.0
        %2151 = vmatpush1.msra.mxu0 0.0
        %2152 = vmatprep.subr.mxu0 0.0
        %2153 = vmatpush1.msra.mxu0 0.0
        %2154 = vmatprep.subr.mxu0 0.0
        %2155 = vmatpush1.msra.mxu0 0.0
        %2156 = vmatprep.subr.mxu0 0.0
        %2157 = vmatpush1.msra.mxu0 0.0
        %2158 = vmatprep.subr.mxu0 0.0
        %2159 = vmatpush1.msra.mxu0 0.0
        %2160 = vmatprep.subr.mxu0 0.0
        %2161 = vmatpush1.msra.mxu0 0.0
        %2162 = vmatprep.subr.mxu0 0.0
        %2163 = vmatpush1.msra.mxu0 0.0
        %2164 = vmatprep.mubr.f32.mxu0 0.0
        %2165 = vmatmul.mubr.f32.gmra.mrb[0].mxu0 %v2098
        %v2166 = vpop.f32.mrb[0].mxu0
        %v2167 = vadd.f32 %v2075, %v2166
        %v2168 = vpop.f32.mrb[0].mxu0
        %2169 = vdwg.mxu0
        %v2170 = vmax.f32 %v2167, 0.0
        %2171 = vst.msk [vmem:[%s391] sm:$0xff] %vm443, %v2170
        %s2172 = sand.u32 %s224, 1
        %s2173 = scalar_lea.sflag [#allocation4], %s2172
        %s2174 = sand.u32 %s224, 1
        %s2175 = smul.addr %s2174, 8
        %s2176 = scalar_lea.vmem [#allocation7], %s2175
        // Predicated region
        $region61: #{tpu_custom_call.1} parent=51 // pred_check
          %p2177 = pneg %p234
        $region62: #{tpu_custom_call.1} parent=51 // pred_check_branch
          %2179 = sbr.rel (%p2177) target = $region64
        $region63: #{tpu_custom_call.1} parent=51 // pred_region
          %s2181 = ssub.s32 128, 128
          %2182 = vsyncadd %s2173, %s2181
          %s2183 = smul.addr %s28, 128
          %s2184 = scalar_lea.hbm %s8, %s2183
          %s2186 = sshll.u32 %s2176, 4
          %s2187 = int_to_ptr.vmem [resolvable:$true] %s2186
          %2189 = dma.vmem_to_hbm [thread:$0]  %s2187, 128, %s2184, %s2173
        $region64: #{tpu_custom_call.1} parent=51 // pred_fallthru
          _
      $region52: #{tpu_custom_call.1} parent=5 // pred_fallthru
        _
      %p2190 = scmp.le.s32.totalorder 2, %s23
      // Predicated region
      $region65: #{tpu_custom_call.1} parent=5 // pred_check
        %p2191 = pneg %p2190
      $region66: #{tpu_custom_call.1} parent=5 // pred_check_branch
        %2193 = sbr.rel (%p2191) target = $region68
      $region67: #{tpu_custom_call.1} parent=5 // pred_region
        %s2194 = ssub.s32 %s23, 2
        // Predicated region
        $region69: #{tpu_custom_call.1} parent=67 // pred_check
          %p2195 = pneg %p240
        $region70: #{tpu_custom_call.1} parent=67 // pred_check_branch
          %2197 = sbr.rel (%p2195) target = $region72
        $region71: #{tpu_custom_call.1} parent=67 // pred_region
          %s2198 = sand.u32 %s225, 1
          %s2199 = scalar_lea.sflag [#allocation4], %s2198
          %s2200 = sand.u32 %s225, 1
          %s2201 = smul.addr %s2200, 8
          %s2202 = scalar_lea.vmem [#allocation7], %s2201
          %2203 = dma.done %s2199, 128
        $region72: #{tpu_custom_call.1} parent=67 // pred_fallthru
          _
      $region68: #{tpu_custom_call.1} parent=5 // pred_fallthru
        _
    $region6: #{tpu_custom_call.1} parent=1 // loop_footer
      %s27 = sadd.s32 1, %s23
    $region7: #{tpu_custom_call.1} parent=1 // loop_footer_branch
      %22 = sbr.rel target = $region3
    $region8: #{tpu_custom_call.1} parent=1 // loop_exit
      _
    %2204 = vsyncpa [#allocation3], 1
    %s2205 = scalar_lea.sflag [#allocation3], 1
    %2206 = vsyncpa %s2205, 1
    %2207 = vsyncpa [#allocation6], 1
    %s2208 = scalar_lea.sflag [#allocation6], 1
    %2209 = vsyncpa %s2208, 1
    %2210 = vsyncpa [#allocation4], 1
    %s2211 = scalar_lea.sflag [#allocation4], 1
    %2212 = vsyncpa %s2211, 1

</llo_original>
